<compile_context>
chip_gen: v5e
topology: v5e:2x2
jax: 0.10.0
libtpu: 0.0.40
codegen_flags: <defaults>
</compile_context>

<pallas_src>
import functools
import math

import jax
import jax.numpy as jnp
from jax.experimental import pallas as pl
from jax.experimental.pallas import tpu as pltpu


@functools.lru_cache(maxsize=None)
def _vmem_limit_bytes():
    """Per-generation scoped-VMEM limit: ~3/4 of physical, capped at 100 MiB.
    -> ~96 MiB on v5e/v6e (128 MiB physical), ~48 MiB on v7x (64 MiB)."""
    cap = 64 * 1024 * 1024
    try:
        info = pltpu.get_tpu_info()
        cap = int(getattr(info, "vmem_capacity_bytes", cap) or cap)
    except Exception:
        pass
    return int(min(cap * 3 // 4, 100 * 1024 * 1024))


def _compiler_params():
    return pltpu.CompilerParams(
        dimension_semantics=("parallel",),
        vmem_limit_bytes=_vmem_limit_bytes(),
    )


def _pick_row_tile(m, target=512):
    """Row tile for (rows, d) activations: the largest multiple of 8 dividing
    m, capped at `target`.  When the whole problem would be a single big block
    (>= 1024 rows) split in two so a v7x megacore gets two parallel grid
    steps; small problems stay single-block (per-step overhead dominates)."""
    t = max(8, min(target, m))
    t = (t // 8) * 8
    while t > 8 and m % t:
        t -= 8
    if m % t:
        return m          # fall back to one full block (still legal)
    if t == m and m >= 1024 and (m // 2) % 8 == 0:
        t = m // 2
    return t


# ----------------------------- Pallas kernels -----------------------------

def _proj_embed_kernel(x_ref, w_ref, b_ref, pe_ref, o_ref):
    """1x1-conv projection of the stacked image pair + (pos + idx) epilogue.

    x : (S=2*HW, C) for one batch element (image1 rows then image2 rows),
    w : (C, d) bf16, b : (1, d) f32, pe : (S, d) pos+idx table, o : (S, d).
    """
    y = jnp.dot(x_ref[...].astype(jnp.bfloat16), w_ref[...],
                preferred_element_type=jnp.float32)
    o_ref[...] = (y + b_ref[...] + pe_ref[...]).astype(o_ref.dtype)


def _mha_block_kernel(x_ref, wq_ref, wk_ref, wv_ref, wo_ref,
                      bq_ref, bk_ref, bv_ref, bo_ref,
                      g_ref, bln_ref, o_ref, acc_ref, *, n_head, eps):
    """Fused self-attention block for one batch element (post-norm):
    LN1(x + OutProj(SDPA(QKV(x)))).

    Weights are pre-cast bf16 and laid out per head:
      wq/wk/wv : (n_head, d, dh), wo : (n_head, dh, d),
      bq/bk/bv : (n_head, 1, dh) f32.
    The head loop is an scf.for carrying an f32 VMEM accumulator, so only one
    head's (S,S) intermediates are live at a time and the out-projection is
    accumulated per head (no concat / full-(S,d) re-cast)."""
    x = x_ref[...]                                             # (S, d) f32
    x_bf = x.astype(jnp.bfloat16)
    dh = wq_ref.shape[-1]
    scale = 1.0 / math.sqrt(dh)

    acc_ref[...] = jnp.zeros_like(acc_ref)

    @pl.loop(0, n_head)
    def _(h):
        q = jnp.dot(x_bf, wq_ref[h], preferred_element_type=jnp.float32)
        k = jnp.dot(x_bf, wk_ref[h], preferred_element_type=jnp.float32)
        v = jnp.dot(x_bf, wv_ref[h], preferred_element_type=jnp.float32)
        # fold the 1/sqrt(dh) scale into q (S*dh mults, not S*S)
        q = ((q + bq_ref[h]) * scale).astype(jnp.bfloat16)
        k = (k + bk_ref[h]).astype(jnp.bfloat16)
        v = (v + bv_ref[h]).astype(jnp.bfloat16)

        # scores = q @ k^T (trans_b form, no transpose materialized)
        s = jax.lax.dot_general(q, k, (((1,), (1,)), ((), ())),
                                preferred_element_type=jnp.float32)
        s = s - jnp.max(s, axis=-1, keepdims=True)
        p = jnp.exp(s.astype(jnp.bfloat16))            # bf16 exp (EUP slot)
        denom = jnp.sum(p, axis=-1, keepdims=True, dtype=jnp.float32)
        inv = pl.reciprocal(denom, approx=True)        # (S, 1) f32

        ctx = jnp.dot(p, v, preferred_element_type=jnp.float32)   # (S, dh)
        ctx = (ctx * inv).astype(jnp.bfloat16)         # scale (S,dh) not (S,S)
        # per-head out-projection accumulation
        acc_ref[...] += jnp.dot(ctx, wo_ref[h],
                                preferred_element_type=jnp.float32)

    # residual + LayerNorm1 (f32)
    y = x + acc_ref[...] + bo_ref[...]
    mean = jnp.mean(y, axis=-1, keepdims=True)
    yc = y - mean
    var = jnp.mean(yc * yc, axis=-1, keepdims=True)
    o_ref[...] = (yc * jax.lax.rsqrt(var + eps) * g_ref[...] + bln_ref[...]
                  ).astype(o_ref.dtype)


def _ffn_block_kernel(x_ref, w1_ref, b1_ref, w2_ref, b2_ref,
                      g_ref, bln_ref, o_ref, *, eps):
    """Fused FFN block on a row tile: LN2(x + W2 @ relu(W1 @ x))."""
    x = x_ref[...]                                             # (tm, d) f32
    h = jnp.dot(x.astype(jnp.bfloat16), w1_ref[...],
                preferred_element_type=jnp.float32) + b1_ref[...]
    h = jnp.maximum(h, 0.0)                                    # ReLU
    y = jnp.dot(h.astype(jnp.bfloat16), w2_ref[...],
                preferred_element_type=jnp.float32) + b2_ref[...]
    y = x + y
    mean = jnp.mean(y, axis=-1, keepdims=True)
    yc = y - mean
    var = jnp.mean(yc * yc, axis=-1, keepdims=True)
    o_ref[...] = (yc * jax.lax.rsqrt(var + eps) * g_ref[...] + bln_ref[...]
                  ).astype(o_ref.dtype)


# ----------------------------- kernel wrappers -----------------------------

def proj_embed(x, w, b, posidx):
    B, S, C = x.shape
    d = w.shape[1]
    return pl.pallas_call(
        _proj_embed_kernel,
        grid=(B,),
        in_specs=[
            pl.BlockSpec((None, S, C), lambda i: (i, 0, 0)),
            pl.BlockSpec((C, d), lambda i: (0, 0)),
            pl.BlockSpec((1, d), lambda i: (0, 0)),
            pl.BlockSpec((S, d), lambda i: (0, 0)),
        ],
        out_specs=pl.BlockSpec((None, S, d), lambda i: (i, 0, 0)),
        out_shape=jax.ShapeDtypeStruct((B, S, d), jnp.float32),
        compiler_params=_compiler_params(),
    )(x, w, b, posidx)


def mha_block(x, p, n_head, eps=1e-5):
    B, S, d = x.shape
    dh = d // n_head
    return pl.pallas_call(
        functools.partial(_mha_block_kernel, n_head=n_head, eps=eps),
        grid=(B,),
        in_specs=[
            pl.BlockSpec((None, S, d), lambda i: (i, 0, 0)),
            pl.BlockSpec((n_head, d, dh), lambda i: (0, 0, 0)),
            pl.BlockSpec((n_head, d, dh), lambda i: (0, 0, 0)),
            pl.BlockSpec((n_head, d, dh), lambda i: (0, 0, 0)),
            pl.BlockSpec((n_head, dh, d), lambda i: (0, 0, 0)),
            pl.BlockSpec((n_head, 1, dh), lambda i: (0, 0, 0)),
            pl.BlockSpec((n_head, 1, dh), lambda i: (0, 0, 0)),
            pl.BlockSpec((n_head, 1, dh), lambda i: (0, 0, 0)),
            pl.BlockSpec((1, d), lambda i: (0, 0)),
            pl.BlockSpec((1, d), lambda i: (0, 0)),
            pl.BlockSpec((1, d), lambda i: (0, 0)),
        ],
        out_specs=pl.BlockSpec((None, S, d), lambda i: (i, 0, 0)),
        out_shape=jax.ShapeDtypeStruct((B, S, d), jnp.float32),
        scratch_shapes=[pltpu.VMEM((S, d), jnp.float32)],
        compiler_params=_compiler_params(),
    )(x, p["wq"], p["wk"], p["wv"], p["wo"],
      p["bq"], p["bk"], p["bv"], p["bo"], p["ln1_g"], p["ln1_b"])


def ffn_block(x, p, eps=1e-5):
    M, d = x.shape
    ff = p["ff1_w"].shape[1]
    tm = _pick_row_tile(M)
    return pl.pallas_call(
        functools.partial(_ffn_block_kernel, eps=eps),
        grid=(pl.cdiv(M, tm),),
        in_specs=[
            pl.BlockSpec((tm, d), lambda i: (i, 0)),
            pl.BlockSpec((d, ff), lambda i: (0, 0)),
            pl.BlockSpec((1, ff), lambda i: (0, 0)),
            pl.BlockSpec((ff, d), lambda i: (0, 0)),
            pl.BlockSpec((1, d), lambda i: (0, 0)),
            pl.BlockSpec((1, d), lambda i: (0, 0)),
            pl.BlockSpec((1, d), lambda i: (0, 0)),
        ],
        out_specs=pl.BlockSpec((tm, d), lambda i: (i, 0)),
        out_shape=jax.ShapeDtypeStruct((M, d), jnp.float32),
        compiler_params=_compiler_params(),
    )(x, p["ff1_w"], p["ff1_b"], p["ff2_w"], p["ff2_b"],
      p["ln2_g"], p["ln2_b"])


# ----------------------------- model wiring -----------------------------

def init_params(key, feature_dim, h, w, d_model, n_layers, dim_ff, n_head):
    keys = iter(jax.random.split(key, 32 * (n_layers + 2)))
    dh = d_model // n_head

    def nrm(shape, scale=0.05, dtype=jnp.float32):
        return (scale * jax.random.normal(next(keys), shape)).astype(dtype)

    # Matmul weights are stored pre-cast to bf16 (MXU-native): halves weight
    # HBM->VMEM DMA bytes + resident VMEM and removes per-grid-step casts.
    bf = jnp.bfloat16
    params = {
        "proj_w": nrm((feature_dim, d_model), dtype=bf),   # 1x1 conv (Cin,Cout)
        "proj_b": nrm((1, d_model)),
        "idx_emb": nrm((2, d_model)),
        "w_emb": nrm((w, d_model // 2)),
        "h_emb": nrm((h, d_model // 2)),
        "layers": [],
    }
    for _ in range(n_layers):
        params["layers"].append({
            # per-head layout: head axis leading so in-kernel slices are
            # leading-axis indexes (lane-tile safe for any head_dim).
            "wq": nrm((n_head, d_model, dh), dtype=bf),
            "wk": nrm((n_head, d_model, dh), dtype=bf),
            "wv": nrm((n_head, d_model, dh), dtype=bf),
            "wo": nrm((n_head, dh, d_model), dtype=bf),
            "bq": nrm((n_head, 1, dh)),
            "bk": nrm((n_head, 1, dh)),
            "bv": nrm((n_head, 1, dh)),
            "bo": nrm((1, d_model)),
            "ff1_w": nrm((d_model, dim_ff), dtype=bf),
            "ff1_b": nrm((1, dim_ff)),
            "ff2_w": nrm((dim_ff, d_model), dtype=bf),
            "ff2_b": nrm((1, d_model)),
            "ln1_g": jnp.ones((1, d_model), jnp.float32),
            "ln1_b": jnp.zeros((1, d_model), jnp.float32),
            "ln2_g": jnp.ones((1, d_model), jnp.float32),
            "ln2_b": jnp.zeros((1, d_model), jnp.float32),
        })
    return params


def mccformers_s1_forward(params, img_feat1, img_feat2, *, n_head):
    B, C, H, W = img_feat1.shape
    d = params["proj_w"].shape[1]
    HW = H * W
    S = 2 * HW

    # NCHW -> (B, HW, C) and stack both images -> (B, S, C): one cheap XLA
    # relayout of the raw inputs (C small), so the projection kernel does a
    # single (S,C)@(C,d) matmul with no in-kernel concat.
    x1 = img_feat1.reshape(B, C, HW).transpose(0, 2, 1)
    x2 = img_feat2.reshape(B, C, HW).transpose(0, 2, 1)
    x = jnp.concatenate([x1, x2], axis=1)                       # (B, S, C)

    # Positional + index embeddings folded into one (S, d) table (parameter
    # sized, built once) so the projection kernel adds them in its epilogue.
    pos = jnp.concatenate(
        [jnp.broadcast_to(params["w_emb"][None, :, :], (H, W, d // 2)),
         jnp.broadcast_to(params["h_emb"][:, None, :], (H, W, d // 2))],
        axis=-1).reshape(HW, d)
    posidx = jnp.concatenate(
        [pos + params["idx_emb"][0][None, :],
         pos + params["idx_emb"][1][None, :]], axis=0)          # (S, d)

    # Fused 1x1-conv projection + embeddings for both images -> (B, S, d).
    feat = proj_embed(x, params["proj_w"], params["proj_b"], posidx)

    # Transformer encoder: two fused kernels per layer (eval mode, post-norm).
    for lp in params["layers"]:
        feat = mha_block(feat, lp, n_head)
        feat = ffn_block(feat.reshape(B * S, d), lp).reshape(B, S, d)

    # (B, S, d) -> (HW, B, 2d): concat image1/image2 channels, seq-first.
    out = jnp.concatenate([feat[:, :HW, :], feat[:, HW:, :]], axis=-1)
    return out.transpose(1, 0, 2)


if __name__ == "__main__":
    # Small shapes consistent with the module's forward.
    BATCH, FEATURE_DIM, H, W = 2, 4, 4, 4
    D_MODEL, N_HEAD, N_LAYERS, DIM_FF = 32, 4, 2, 64

    key = jax.random.PRNGKey(0)
    k_params, k1, k2 = jax.random.split(key, 3)

    params = init_params(k_params, FEATURE_DIM, H, W, D_MODEL, N_LAYERS,
                         DIM_FF, N_HEAD)
    img_feat1 = jax.random.normal(k1, (BATCH, FEATURE_DIM, H, W), jnp.float32)
    img_feat2 = jax.random.normal(k2, (BATCH, FEATURE_DIM, H, W), jnp.float32)

    fwd = jax.jit(functools.partial(mccformers_s1_forward, n_head=N_HEAD))
    out = fwd(params, img_feat1, img_feat2)
    out = jax.block_until_ready(out)

    assert out.shape == (H * W, BATCH, 2 * D_MODEL), out.shape
    assert jnp.all(jnp.isfinite(out))
    print("KERNEL_OK")
</pallas_src>

<mosaic_0001>
module attributes {stable_mosaic.version = 11 : i64} {
  func.func @_proj_embed_kernel(%arg0: i32, %arg1: memref<1x32x4xf32, #tpu.memory_space<vmem>>, %arg2: memref<4x32xbf16, #tpu.memory_space<vmem>>, %arg3: memref<1x32xf32, #tpu.memory_space<vmem>>, %arg4: memref<32x32xf32, #tpu.memory_space<vmem>>, %arg5: memref<1x32x32xf32, #tpu.memory_space<vmem>>) attributes {dimension_semantics = [#tpu.dimension_semantics<parallel>], iteration_bounds = array<i64: 2>, scalar_prefetch = 0 : i64, scratch_operands = 0 : i64, tpu.core_type = #tpu.core_type<tc>, window_params = [{transform_indices = @transform_0, window_bounds = array<i64: 1, 32, 4>}, {pipeline_mode = #tpu.pipeline_mode<synchronous>, transform_indices = @transform_1, window_bounds = array<i64: 4, 32>}, {pipeline_mode = #tpu.pipeline_mode<synchronous>, transform_indices = @transform_2, window_bounds = array<i64: 1, 32>}, {pipeline_mode = #tpu.pipeline_mode<synchronous>, transform_indices = @transform_3, window_bounds = array<i64: 32, 32>}, {transform_indices = @transform_4, window_bounds = array<i64: 1, 32, 32>}]} {
    %c0 = arith.constant 0 : index
    %c0_0 = arith.constant 0 : index
    %c0_1 = arith.constant 0 : index
    %0 = vector.load %arg1[%c0, %c0_0, %c0_1] : memref<1x32x4xf32, #tpu.memory_space<vmem>>, vector<1x32x4xf32>
    %1 = vector.shape_cast %0 : vector<1x32x4xf32> to vector<32x4xf32>
    %2 = arith.truncf %1 : vector<32x4xf32> to vector<32x4xbf16>
    %c0_2 = arith.constant 0 : index
    %c0_3 = arith.constant 0 : index
    %3 = vector.load %arg2[%c0_2, %c0_3] : memref<4x32xbf16, #tpu.memory_space<vmem>>, vector<4x32xbf16>
    %cst = arith.constant dense<0.000000e+00> : vector<32x32xf32>
    %4 = tpu.matmul %2, %3, %cst {dimension_numbers = #tpu.dot_dimension_numbers<[1], [0], [0], [1], [0, 0, 1, 1], [], []>} : vector<32x4xbf16>, vector<4x32xbf16>, vector<32x32xf32> -> vector<32x32xf32>
    %c0_4 = arith.constant 0 : index
    %c0_5 = arith.constant 0 : index
    %5 = vector.load %arg3[%c0_4, %c0_5] : memref<1x32xf32, #tpu.memory_space<vmem>>, vector<1x32xf32>
    %6 = vector.broadcast %5 : vector<1x32xf32> to vector<32x32xf32>
    %7 = arith.addf %4, %6 : vector<32x32xf32>
    %c0_6 = arith.constant 0 : index
    %c0_7 = arith.constant 0 : index
    %8 = vector.load %arg4[%c0_6, %c0_7] : memref<32x32xf32, #tpu.memory_space<vmem>>, vector<32x32xf32>
    %9 = arith.addf %7, %8 : vector<32x32xf32>
    %c0_8 = arith.constant 0 : index
    %c0_9 = arith.constant 0 : index
    %c0_10 = arith.constant 0 : index
    %10 = vector.load %arg5[%c0_8, %c0_9, %c0_10] : memref<1x32x32xf32, #tpu.memory_space<vmem>>, vector<1x32x32xf32>
    %11 = vector.shape_cast %10 : vector<1x32x32xf32> to vector<32x32xf32>
    %12 = vector.shape_cast %9 : vector<32x32xf32> to vector<1x32x32xf32>
    tpu.vector_store %arg5[%c0_8, %c0_9, %c0_10], %12 {strides = array<i32>} : memref<1x32x32xf32, #tpu.memory_space<vmem>>, vector<1x32x32xf32>,
    return
  }
  func.func @transform_0(%arg0: i32) -> (i32, i32, i32) {
    %c0_i32 = arith.constant 0 : i32
    %c0_i32_0 = arith.constant 0 : i32
    %c0_i32_1 = arith.constant 0 : i32
    return %arg0, %c0_i32, %c0_i32_0 : i32, i32, i32
  }
  func.func @transform_1(%arg0: i32) -> (i32, i32) {
    %c0_i32 = arith.constant 0 : i32
    %c0_i32_0 = arith.constant 0 : i32
    %c0_i32_1 = arith.constant 0 : i32
    return %c0_i32, %c0_i32_0 : i32, i32
  }
  func.func @transform_2(%arg0: i32) -> (i32, i32) {
    %c0_i32 = arith.constant 0 : i32
    %c0_i32_0 = arith.constant 0 : i32
    %c0_i32_1 = arith.constant 0 : i32
    return %c0_i32, %c0_i32_0 : i32, i32
  }
  func.func @transform_3(%arg0: i32) -> (i32, i32) {
    %c0_i32 = arith.constant 0 : i32
    %c0_i32_0 = arith.constant 0 : i32
    %c0_i32_1 = arith.constant 0 : i32
    return %c0_i32, %c0_i32_0 : i32, i32
  }
  func.func @transform_4(%arg0: i32) -> (i32, i32, i32) {
    %c0_i32 = arith.constant 0 : i32
    %c0_i32_0 = arith.constant 0 : i32
    %c0_i32_1 = arith.constant 0 : i32
    return %arg0, %c0_i32, %c0_i32_0 : i32, i32, i32
  }
}

module attributes {stable_mosaic.version = 11 : i64} {
  func.func @_mha_block_kernel(%arg0: i32, %arg1: memref<1x32x32xf32, #tpu.memory_space<vmem>>, %arg2: memref<4x32x8xbf16, #tpu.memory_space<vmem>>, %arg3: memref<4x32x8xbf16, #tpu.memory_space<vmem>>, %arg4: memref<4x32x8xbf16, #tpu.memory_space<vmem>>, %arg5: memref<4x8x32xbf16, #tpu.memory_space<vmem>>, %arg6: memref<4x1x8xf32, #tpu.memory_space<vmem>>, %arg7: memref<4x1x8xf32, #tpu.memory_space<vmem>>, %arg8: memref<4x1x8xf32, #tpu.memory_space<vmem>>, %arg9: memref<1x32xf32, #tpu.memory_space<vmem>>, %arg10: memref<1x32xf32, #tpu.memory_space<vmem>>, %arg11: memref<1x32xf32, #tpu.memory_space<vmem>>, %arg12: memref<1x32x32xf32, #tpu.memory_space<vmem>>, %arg13: memref<32x32xf32, #tpu.memory_space<vmem>>) attributes {dimension_semantics = [#tpu.dimension_semantics<parallel>], iteration_bounds = array<i64: 2>, scalar_prefetch = 0 : i64, scratch_operands = 1 : i64, tpu.core_type = #tpu.core_type<tc>, window_params = [{transform_indices = @transform_0, window_bounds = array<i64: 1, 32, 32>}, {pipeline_mode = #tpu.pipeline_mode<synchronous>, transform_indices = @transform_1, window_bounds = array<i64: 4, 32, 8>}, {pipeline_mode = #tpu.pipeline_mode<synchronous>, transform_indices = @transform_2, window_bounds = array<i64: 4, 32, 8>}, {pipeline_mode = #tpu.pipeline_mode<synchronous>, transform_indices = @transform_3, window_bounds = array<i64: 4, 32, 8>}, {pipeline_mode = #tpu.pipeline_mode<synchronous>, transform_indices = @transform_4, window_bounds = array<i64: 4, 8, 32>}, {pipeline_mode = #tpu.pipeline_mode<synchronous>, transform_indices = @transform_5, window_bounds = array<i64: 4, 1, 8>}, {pipeline_mode = #tpu.pipeline_mode<synchronous>, transform_indices = @transform_6, window_bounds = array<i64: 4, 1, 8>}, {pipeline_mode = #tpu.pipeline_mode<synchronous>, transform_indices = @transform_7, window_bounds = array<i64: 4, 1, 8>}, {pipeline_mode = #tpu.pipeline_mode<synchronous>, transform_indices = @transform_8, window_bounds = array<i64: 1, 32>}, {pipeline_mode = #tpu.pipeline_mode<synchronous>, transform_indices = @transform_9, window_bounds = array<i64: 1, 32>}, {pipeline_mode = #tpu.pipeline_mode<synchronous>, transform_indices = @transform_10, window_bounds = array<i64: 1, 32>}, {transform_indices = @transform_11, window_bounds = array<i64: 1, 32, 32>}]} {
    %c0 = arith.constant 0 : index
    %c0_0 = arith.constant 0 : index
    %c0_1 = arith.constant 0 : index
    %0 = vector.load %arg1[%c0, %c0_0, %c0_1] : memref<1x32x32xf32, #tpu.memory_space<vmem>>, vector<1x32x32xf32>
    %1 = vector.shape_cast %0 : vector<1x32x32xf32> to vector<32x32xf32>
    %2 = arith.truncf %1 : vector<32x32xf32> to vector<32x32xbf16>
    %cst = arith.constant 0.000000e+00 : f32
    %3 = vector.broadcast %cst : f32 to vector<32x32xf32>
    %c0_2 = arith.constant 0 : index
    %c0_3 = arith.constant 0 : index
    %4 = vector.load %arg13[%c0_2, %c0_3] : memref<32x32xf32, #tpu.memory_space<vmem>>, vector<32x32xf32>
    tpu.vector_store %arg13[%c0_2, %c0_3], %3 {strides = array<i32>} : memref<32x32xf32, #tpu.memory_space<vmem>>, vector<32x32xf32>,
    %c0_i32 = arith.constant 0 : i32
    %c4_i32 = arith.constant 4 : i32
    %5 = arith.addi %c0_i32, %c4_i32 : i32
    %c1_i32 = arith.constant 1 : i32
    scf.for %arg14 = %c0_i32 to %5 step %c1_i32  : i32 {
      %c1_i32_21 = arith.constant 1 : i32
      %36 = arith.muli %arg14, %c1_i32_21 : i32
      %c0_i32_22 = arith.constant 0 : i32
      %37 = arith.addi %c0_i32_22, %36 : i32
      %38 = arith.index_cast %37 : i32 to index
      %c0_23 = arith.constant 0 : index
      %c0_24 = arith.constant 0 : index
      %39 = vector.load %arg2[%38, %c0_23, %c0_24] : memref<4x32x8xbf16, #tpu.memory_space<vmem>>, vector<1x32x8xbf16>
      %40 = vector.shape_cast %39 : vector<1x32x8xbf16> to vector<32x8xbf16>
      %cst_25 = arith.constant dense<0.000000e+00> : vector<32x8xf32>
      %41 = tpu.matmul %2, %40, %cst_25 {dimension_numbers = #tpu.dot_dimension_numbers<[1], [0], [0], [1], [0, 0, 1, 1], [], []>} : vector<32x32xbf16>, vector<32x8xbf16>, vector<32x8xf32> -> vector<32x8xf32>
      %42 = arith.index_cast %37 : i32 to index
      %c0_26 = arith.constant 0 : index
      %c0_27 = arith.constant 0 : index
      %43 = vector.load %arg3[%42, %c0_26, %c0_27] : memref<4x32x8xbf16, #tpu.memory_space<vmem>>, vector<1x32x8xbf16>
      %44 = vector.shape_cast %43 : vector<1x32x8xbf16> to vector<32x8xbf16>
      %cst_28 = arith.constant dense<0.000000e+00> : vector<32x8xf32>
      %45 = tpu.matmul %2, %44, %cst_28 {dimension_numbers = #tpu.dot_dimension_numbers<[1], [0], [0], [1], [0, 0, 1, 1], [], []>} : vector<32x32xbf16>, vector<32x8xbf16>, vector<32x8xf32> -> vector<32x8xf32>
      %46 = arith.index_cast %37 : i32 to index
      %c0_29 = arith.constant 0 : index
      %c0_30 = arith.constant 0 : index
      %47 = vector.load %arg4[%46, %c0_29, %c0_30] : memref<4x32x8xbf16, #tpu.memory_space<vmem>>, vector<1x32x8xbf16>
      %48 = vector.shape_cast %47 : vector<1x32x8xbf16> to vector<32x8xbf16>
      %cst_31 = arith.constant dense<0.000000e+00> : vector<32x8xf32>
      %49 = tpu.matmul %2, %48, %cst_31 {dimension_numbers = #tpu.dot_dimension_numbers<[1], [0], [0], [1], [0, 0, 1, 1], [], []>} : vector<32x32xbf16>, vector<32x8xbf16>, vector<32x8xf32> -> vector<32x8xf32>
      %50 = arith.index_cast %37 : i32 to index
      %c0_32 = arith.constant 0 : index
      %c0_33 = arith.constant 0 : index
      %51 = vector.load %arg6[%50, %c0_32, %c0_33] : memref<4x1x8xf32, #tpu.memory_space<vmem>>, vector<1x1x8xf32>
      %52 = vector.shape_cast %51 : vector<1x1x8xf32> to vector<1x8xf32>
      %53 = vector.broadcast %52 : vector<1x8xf32> to vector<32x8xf32>
      %54 = arith.addf %41, %53 : vector<32x8xf32>
      %cst_34 = arith.constant 0.353553385 : f32
      %55 = vector.broadcast %cst_34 : f32 to vector<32x8xf32>
      %56 = arith.mulf %54, %55 : vector<32x8xf32>
      %57 = arith.truncf %56 : vector<32x8xf32> to vector<32x8xbf16>
      %58 = arith.index_cast %37 : i32 to index
      %c0_35 = arith.constant 0 : index
      %c0_36 = arith.constant 0 : index
      %59 = vector.load %arg7[%58, %c0_35, %c0_36] : memref<4x1x8xf32, #tpu.memory_space<vmem>>, vector<1x1x8xf32>
      %60 = vector.shape_cast %59 : vector<1x1x8xf32> to vector<1x8xf32>
      %61 = vector.broadcast %60 : vector<1x8xf32> to vector<32x8xf32>
      %62 = arith.addf %45, %61 : vector<32x8xf32>
      %63 = arith.truncf %62 : vector<32x8xf32> to vector<32x8xbf16>
      %64 = arith.index_cast %37 : i32 to index
      %c0_37 = arith.constant 0 : index
      %c0_38 = arith.constant 0 : index
      %65 = vector.load %arg8[%64, %c0_37, %c0_38] : memref<4x1x8xf32, #tpu.memory_space<vmem>>, vector<1x1x8xf32>
      %66 = vector.shape_cast %65 : vector<1x1x8xf32> to vector<1x8xf32>
      %67 = vector.broadcast %66 : vector<1x8xf32> to vector<32x8xf32>
      %68 = arith.addf %49, %67 : vector<32x8xf32>
      %69 = arith.truncf %68 : vector<32x8xf32> to vector<32x8xbf16>
      %cst_39 = arith.constant dense<0.000000e+00> : vector<32x32xf32>
      %70 = tpu.matmul %57, %63, %cst_39 {dimension_numbers = #tpu.dot_dimension_numbers<[1], [1], [0], [0], [0, 0, 1, 0], [], []>} : vector<32x8xbf16>, vector<32x8xbf16>, vector<32x32xf32> -> vector<32x32xf32>
      %cst_40 = arith.constant dense<0xFF800000> : vector<32xf32>
      %71 = vector.multi_reduction <maximumf>, %70, %cst_40 [1] : vector<32x32xf32> to vector<32xf32>
      %72 = vector.shape_cast %71 : vector<32xf32> to vector<32x1xf32>
      %73 = vector.broadcast %72 : vector<32x1xf32> to vector<32x32xf32>
      %74 = arith.subf %70, %73 : vector<32x32xf32>
      %75 = arith.truncf %74 : vector<32x32xf32> to vector<32x32xbf16>
      %76 = math.exp %75 : vector<32x32xbf16>
      %77 = arith.extf %76 : vector<32x32xbf16> to vector<32x32xf32>
      %cst_41 = arith.constant dense<0.000000e+00> : vector<32xf32>
      %78 = vector.multi_reduction <add>, %77, %cst_41 [1] : vector<32x32xf32> to vector<32xf32>
      %79 = vector.shape_cast %78 : vector<32xf32> to vector<32x1xf32>
      %80 = tpu.reciprocal %79 {approx = true} : vector<32x1xf32> -> vector<32x1xf32>
      %cst_42 = arith.constant dense<0.000000e+00> : vector<32x8xf32>
      %81 = tpu.matmul %76, %69, %cst_42 {dimension_numbers = #tpu.dot_dimension_numbers<[1], [0], [0], [1], [0, 0, 1, 1], [], []>} : vector<32x32xbf16>, vector<32x8xbf16>, vector<32x8xf32> -> vector<32x8xf32>
      %82 = vector.broadcast %80 : vector<32x1xf32> to vector<32x8xf32>
      %83 = arith.mulf %81, %82 : vector<32x8xf32>
      %84 = arith.truncf %83 : vector<32x8xf32> to vector<32x8xbf16>
      %c0_43 = arith.constant 0 : index
      %c0_44 = arith.constant 0 : index
      %85 = vector.load %arg13[%c0_43, %c0_44] : memref<32x32xf32, #tpu.memory_space<vmem>>, vector<32x32xf32>
      %86 = arith.index_cast %37 : i32 to index
      %c0_45 = arith.constant 0 : index
      %c0_46 = arith.constant 0 : index
      %87 = vector.load %arg5[%86, %c0_45, %c0_46] : memref<4x8x32xbf16, #tpu.memory_space<vmem>>, vector<1x8x32xbf16>
      %88 = vector.shape_cast %87 : vector<1x8x32xbf16> to vector<8x32xbf16>
      %cst_47 = arith.constant dense<0.000000e+00> : vector<32x32xf32>
      %89 = tpu.matmul %84, %88, %cst_47 {dimension_numbers = #tpu.dot_dimension_numbers<[1], [0], [0], [1], [0, 0, 1, 1], [], []>} : vector<32x8xbf16>, vector<8x32xbf16>, vector<32x32xf32> -> vector<32x32xf32>
      %90 = arith.addf %85, %89 : vector<32x32xf32>
      %c0_48 = arith.constant 0 : index
      %c0_49 = arith.constant 0 : index
      %91 = vector.load %arg13[%c0_48, %c0_49] : memref<32x32xf32, #tpu.memory_space<vmem>>, vector<32x32xf32>
      tpu.vector_store %arg13[%c0_48, %c0_49], %90 {strides = array<i32>} : memref<32x32xf32, #tpu.memory_space<vmem>>, vector<32x32xf32>,
    }
    %c4_i32_4 = arith.constant 4 : i32
    %c0_5 = arith.constant 0 : index
    %c0_6 = arith.constant 0 : index
    %6 = vector.load %arg13[%c0_5, %c0_6] : memref<32x32xf32, #tpu.memory_space<vmem>>, vector<32x32xf32>
    %7 = arith.addf %1, %6 : vector<32x32xf32>
    %c0_7 = arith.constant 0 : index
    %c0_8 = arith.constant 0 : index
    %8 = vector.load %arg9[%c0_7, %c0_8] : memref<1x32xf32, #tpu.memory_space<vmem>>, vector<1x32xf32>
    %9 = vector.broadcast %8 : vector<1x32xf32> to vector<32x32xf32>
    %10 = arith.addf %7, %9 : vector<32x32xf32>
    %cst_9 = arith.constant dense<0.000000e+00> : vector<32xf32>
    %11 = vector.multi_reduction <add>, %10, %cst_9 [1] : vector<32x32xf32> to vector<32xf32>
    %12 = vector.shape_cast %11 : vector<32xf32> to vector<32x1xf32>
    %cst_10 = arith.constant 3.200000e+01 : f32
    %13 = vector.broadcast %cst_10 : f32 to vector<32x1xf32>
    %14 = arith.divf %12, %13 : vector<32x1xf32>
    %15 = vector.broadcast %14 : vector<32x1xf32> to vector<32x32xf32>
    %16 = arith.subf %10, %15 : vector<32x32xf32>
    %17 = arith.mulf %16, %16 : vector<32x32xf32>
    %cst_11 = arith.constant dense<0.000000e+00> : vector<32xf32>
    %18 = vector.multi_reduction <add>, %17, %cst_11 [1] : vector<32x32xf32> to vector<32xf32>
    %19 = vector.shape_cast %18 : vector<32xf32> to vector<32x1xf32>
    %cst_12 = arith.constant 3.200000e+01 : f32
    %20 = vector.broadcast %cst_12 : f32 to vector<32x1xf32>
    %21 = arith.divf %19, %20 : vector<32x1xf32>
    %cst_13 = arith.constant 9.99999974E-6 : f32
    %22 = vector.broadcast %cst_13 : f32 to vector<32x1xf32>
    %23 = arith.addf %21, %22 : vector<32x1xf32>
    %24 = math.rsqrt %23 : vector<32x1xf32>
    %25 = vector.broadcast %24 : vector<32x1xf32> to vector<32x32xf32>
    %26 = arith.mulf %16, %25 : vector<32x32xf32>
    %c0_14 = arith.constant 0 : index
    %c0_15 = arith.constant 0 : index
    %27 = vector.load %arg10[%c0_14, %c0_15] : memref<1x32xf32, #tpu.memory_space<vmem>>, vector<1x32xf32>
    %28 = vector.broadcast %27 : vector<1x32xf32> to vector<32x32xf32>
    %29 = arith.mulf %26, %28 : vector<32x32xf32>
    %c0_16 = arith.constant 0 : index
    %c0_17 = arith.constant 0 : index
    %30 = vector.load %arg11[%c0_16, %c0_17] : memref<1x32xf32, #tpu.memory_space<vmem>>, vector<1x32xf32>
    %31 = vector.broadcast %30 : vector<1x32xf32> to vector<32x32xf32>
    %32 = arith.addf %29, %31 : vector<32x32xf32>
    %c0_18 = arith.constant 0 : index
    %c0_19 = arith.constant 0 : index
    %c0_20 = arith.constant 0 : index
    %33 = vector.load %arg12[%c0_18, %c0_19, %c0_20] : memref<1x32x32xf32, #tpu.memory_space<vmem>>, vector<1x32x32xf32>
    %34 = vector.shape_cast %33 : vector<1x32x32xf32> to vector<32x32xf32>
    %35 = vector.shape_cast %32 : vector<32x32xf32> to vector<1x32x32xf32>
    tpu.vector_store %arg12[%c0_18, %c0_19, %c0_20], %35 {strides = array<i32>} : memref<1x32x32xf32, #tpu.memory_space<vmem>>, vector<1x32x32xf32>,
    return
  }
  func.func @transform_0(%arg0: i32) -> (i32, i32, i32) {
    %c0_i32 = arith.constant 0 : i32
    %c0_i32_0 = arith.constant 0 : i32
    %c0_i32_1 = arith.constant 0 : i32
    return %arg0, %c0_i32, %c0_i32_0 : i32, i32, i32
  }
  func.func @transform_1(%arg0: i32) -> (i32, i32, i32) {
    %c0_i32 = arith.constant 0 : i32
    %c0_i32_0 = arith.constant 0 : i32
    %c0_i32_1 = arith.constant 0 : i32
    %c0_i32_2 = arith.constant 0 : i32
    return %c0_i32, %c0_i32_0, %c0_i32_1 : i32, i32, i32
  }
  func.func @transform_2(%arg0: i32) -> (i32, i32, i32) {
    %c0_i32 = arith.constant 0 : i32
    %c0_i32_0 = arith.constant 0 : i32
    %c0_i32_1 = arith.constant 0 : i32
    %c0_i32_2 = arith.constant 0 : i32
    return %c0_i32, %c0_i32_0, %c0_i32_1 : i32, i32, i32
  }
  func.func @transform_3(%arg0: i32) -> (i32, i32, i32) {
    %c0_i32 = arith.constant 0 : i32
    %c0_i32_0 = arith.constant 0 : i32
    %c0_i32_1 = arith.constant 0 : i32
    %c0_i32_2 = arith.constant 0 : i32
    return %c0_i32, %c0_i32_0, %c0_i32_1 : i32, i32, i32
  }
  func.func @transform_4(%arg0: i32) -> (i32, i32, i32) {
    %c0_i32 = arith.constant 0 : i32
    %c0_i32_0 = arith.constant 0 : i32
    %c0_i32_1 = arith.constant 0 : i32
    %c0_i32_2 = arith.constant 0 : i32
    return %c0_i32, %c0_i32_0, %c0_i32_1 : i32, i32, i32
  }
  func.func @transform_5(%arg0: i32) -> (i32, i32, i32) {
    %c0_i32 = arith.constant 0 : i32
    %c0_i32_0 = arith.constant 0 : i32
    %c0_i32_1 = arith.constant 0 : i32
    %c0_i32_2 = arith.constant 0 : i32
    return %c0_i32, %c0_i32_0, %c0_i32_1 : i32, i32, i32
  }
  func.func @transform_6(%arg0: i32) -> (i32, i32, i32) {
    %c0_i32 = arith.constant 0 : i32
    %c0_i32_0 = arith.constant 0 : i32
    %c0_i32_1 = arith.constant 0 : i32
    %c0_i32_2 = arith.constant 0 : i32
    return %c0_i32, %c0_i32_0, %c0_i32_1 : i32, i32, i32
  }
  func.func @transform_7(%arg0: i32) -> (i32, i32, i32) {
    %c0_i32 = arith.constant 0 : i32
    %c0_i32_0 = arith.constant 0 : i32
    %c0_i32_1 = arith.constant 0 : i32
    %c0_i32_2 = arith.constant 0 : i32
    return %c0_i32, %c0_i32_0, %c0_i32_1 : i32, i32, i32
  }
  func.func @transform_8(%arg0: i32) -> (i32, i32) {
    %c0_i32 = arith.constant 0 : i32
    %c0_i32_0 = arith.constant 0 : i32
    %c0_i32_1 = arith.constant 0 : i32
    return %c0_i32, %c0_i32_0 : i32, i32
  }
  func.func @transform_9(%arg0: i32) -> (i32, i32) {
    %c0_i32 = arith.constant 0 : i32
    %c0_i32_0 = arith.constant 0 : i32
    %c0_i32_1 = arith.constant 0 : i32
    return %c0_i32, %c0_i32_0 : i32, i32
  }
  func.func @transform_10(%arg0: i32) -> (i32, i32) {
    %c0_i32 = arith.constant 0 : i32
    %c0_i32_0 = arith.constant 0 : i32
    %c0_i32_1 = arith.constant 0 : i32
    return %c0_i32, %c0_i32_0 : i32, i32
  }
  func.func @transform_11(%arg0: i32) -> (i32, i32, i32) {
    %c0_i32 = arith.constant 0 : i32
    %c0_i32_0 = arith.constant 0 : i32
    %c0_i32_1 = arith.constant 0 : i32
    return %arg0, %c0_i32, %c0_i32_0 : i32, i32, i32
  }
}

module attributes {stable_mosaic.version = 11 : i64} {
  func.func @_ffn_block_kernel(%arg0: i32, %arg1: memref<64x32xf32, #tpu.memory_space<vmem>>, %arg2: memref<32x64xbf16, #tpu.memory_space<vmem>>, %arg3: memref<1x64xf32, #tpu.memory_space<vmem>>, %arg4: memref<64x32xbf16, #tpu.memory_space<vmem>>, %arg5: memref<1x32xf32, #tpu.memory_space<vmem>>, %arg6: memref<1x32xf32, #tpu.memory_space<vmem>>, %arg7: memref<1x32xf32, #tpu.memory_space<vmem>>, %arg8: memref<64x32xf32, #tpu.memory_space<vmem>>) attributes {dimension_semantics = [#tpu.dimension_semantics<parallel>], iteration_bounds = array<i64: 1>, scalar_prefetch = 0 : i64, scratch_operands = 0 : i64, tpu.core_type = #tpu.core_type<tc>, window_params = [{transform_indices = @transform_0, window_bounds = array<i64: 64, 32>}, {pipeline_mode = #tpu.pipeline_mode<synchronous>, transform_indices = @transform_1, window_bounds = array<i64: 32, 64>}, {pipeline_mode = #tpu.pipeline_mode<synchronous>, transform_indices = @transform_2, window_bounds = array<i64: 1, 64>}, {pipeline_mode = #tpu.pipeline_mode<synchronous>, transform_indices = @transform_3, window_bounds = array<i64: 64, 32>}, {pipeline_mode = #tpu.pipeline_mode<synchronous>, transform_indices = @transform_4, window_bounds = array<i64: 1, 32>}, {pipeline_mode = #tpu.pipeline_mode<synchronous>, transform_indices = @transform_5, window_bounds = array<i64: 1, 32>}, {pipeline_mode = #tpu.pipeline_mode<synchronous>, transform_indices = @transform_6, window_bounds = array<i64: 1, 32>}, {transform_indices = @transform_7, window_bounds = array<i64: 64, 32>}]} {
    %c0 = arith.constant 0 : index
    %c0_0 = arith.constant 0 : index
    %0 = vector.load %arg1[%c0, %c0_0] : memref<64x32xf32, #tpu.memory_space<vmem>>, vector<64x32xf32>
    %1 = arith.truncf %0 : vector<64x32xf32> to vector<64x32xbf16>
    %c0_1 = arith.constant 0 : index
    %c0_2 = arith.constant 0 : index
    %2 = vector.load %arg2[%c0_1, %c0_2] : memref<32x64xbf16, #tpu.memory_space<vmem>>, vector<32x64xbf16>
    %cst = arith.constant dense<0.000000e+00> : vector<64x64xf32>
    %3 = tpu.matmul %1, %2, %cst {dimension_numbers = #tpu.dot_dimension_numbers<[1], [0], [0], [1], [0, 0, 1, 1], [], []>} : vector<64x32xbf16>, vector<32x64xbf16>, vector<64x64xf32> -> vector<64x64xf32>
    %c0_3 = arith.constant 0 : index
    %c0_4 = arith.constant 0 : index
    %4 = vector.load %arg3[%c0_3, %c0_4] : memref<1x64xf32, #tpu.memory_space<vmem>>, vector<1x64xf32>
    %5 = vector.broadcast %4 : vector<1x64xf32> to vector<64x64xf32>
    %6 = arith.addf %3, %5 : vector<64x64xf32>
    %cst_5 = arith.constant 0.000000e+00 : f32
    %7 = vector.broadcast %cst_5 : f32 to vector<64x64xf32>
    %8 = arith.maximumf %6, %7 : vector<64x64xf32>
    %9 = arith.truncf %8 : vector<64x64xf32> to vector<64x64xbf16>
    %c0_6 = arith.constant 0 : index
    %c0_7 = arith.constant 0 : index
    %10 = vector.load %arg4[%c0_6, %c0_7] : memref<64x32xbf16, #tpu.memory_space<vmem>>, vector<64x32xbf16>
    %cst_8 = arith.constant dense<0.000000e+00> : vector<64x32xf32>
    %11 = tpu.matmul %9, %10, %cst_8 {dimension_numbers = #tpu.dot_dimension_numbers<[1], [0], [0], [1], [0, 0, 1, 1], [], []>} : vector<64x64xbf16>, vector<64x32xbf16>, vector<64x32xf32> -> vector<64x32xf32>
    %c0_9 = arith.constant 0 : index
    %c0_10 = arith.constant 0 : index
    %12 = vector.load %arg5[%c0_9, %c0_10] : memref<1x32xf32, #tpu.memory_space<vmem>>, vector<1x32xf32>
    %13 = vector.broadcast %12 : vector<1x32xf32> to vector<64x32xf32>
    %14 = arith.addf %11, %13 : vector<64x32xf32>
    %15 = arith.addf %0, %14 : vector<64x32xf32>
    %cst_11 = arith.constant dense<0.000000e+00> : vector<64xf32>
    %16 = vector.multi_reduction <add>, %15, %cst_11 [1] : vector<64x32xf32> to vector<64xf32>
    %17 = vector.shape_cast %16 : vector<64xf32> to vector<64x1xf32>
    %cst_12 = arith.constant 3.200000e+01 : f32
    %18 = vector.broadcast %cst_12 : f32 to vector<64x1xf32>
    %19 = arith.divf %17, %18 : vector<64x1xf32>
    %20 = vector.broadcast %19 : vector<64x1xf32> to vector<64x32xf32>
    %21 = arith.subf %15, %20 : vector<64x32xf32>
    %22 = arith.mulf %21, %21 : vector<64x32xf32>
    %cst_13 = arith.constant dense<0.000000e+00> : vector<64xf32>
    %23 = vector.multi_reduction <add>, %22, %cst_13 [1] : vector<64x32xf32> to vector<64xf32>
    %24 = vector.shape_cast %23 : vector<64xf32> to vector<64x1xf32>
    %cst_14 = arith.constant 3.200000e+01 : f32
    %25 = vector.broadcast %cst_14 : f32 to vector<64x1xf32>
    %26 = arith.divf %24, %25 : vector<64x1xf32>
    %cst_15 = arith.constant 9.99999974E-6 : f32
    %27 = vector.broadcast %cst_15 : f32 to vector<64x1xf32>
    %28 = arith.addf %26, %27 : vector<64x1xf32>
    %29 = math.rsqrt %28 : vector<64x1xf32>
    %30 = vector.broadcast %29 : vector<64x1xf32> to vector<64x32xf32>
    %31 = arith.mulf %21, %30 : vector<64x32xf32>
    %c0_16 = arith.constant 0 : index
    %c0_17 = arith.constant 0 : index
    %32 = vector.load %arg6[%c0_16, %c0_17] : memref<1x32xf32, #tpu.memory_space<vmem>>, vector<1x32xf32>
    %33 = vector.broadcast %32 : vector<1x32xf32> to vector<64x32xf32>
    %34 = arith.mulf %31, %33 : vector<64x32xf32>
    %c0_18 = arith.constant 0 : index
    %c0_19 = arith.constant 0 : index
    %35 = vector.load %arg7[%c0_18, %c0_19] : memref<1x32xf32, #tpu.memory_space<vmem>>, vector<1x32xf32>
    %36 = vector.broadcast %35 : vector<1x32xf32> to vector<64x32xf32>
    %37 = arith.addf %34, %36 : vector<64x32xf32>
    %c0_20 = arith.constant 0 : index
    %c0_21 = arith.constant 0 : index
    %38 = vector.load %arg8[%c0_20, %c0_21] : memref<64x32xf32, #tpu.memory_space<vmem>>, vector<64x32xf32>
    tpu.vector_store %arg8[%c0_20, %c0_21], %37 {strides = array<i32>} : memref<64x32xf32, #tpu.memory_space<vmem>>, vector<64x32xf32>,
    return
  }
  func.func @transform_0(%arg0: i32) -> (i32, i32) {
    %c0_i32 = arith.constant 0 : i32
    %c0_i32_0 = arith.constant 0 : i32
    return %arg0, %c0_i32 : i32, i32
  }
  func.func @transform_1(%arg0: i32) -> (i32, i32) {
    %c0_i32 = arith.constant 0 : i32
    %c0_i32_0 = arith.constant 0 : i32
    %c0_i32_1 = arith.constant 0 : i32
    return %c0_i32, %c0_i32_0 : i32, i32
  }
  func.func @transform_2(%arg0: i32) -> (i32, i32) {
    %c0_i32 = arith.constant 0 : i32
    %c0_i32_0 = arith.constant 0 : i32
    %c0_i32_1 = arith.constant 0 : i32
    return %c0_i32, %c0_i32_0 : i32, i32
  }
  func.func @transform_3(%arg0: i32) -> (i32, i32) {
    %c0_i32 = arith.constant 0 : i32
    %c0_i32_0 = arith.constant 0 : i32
    %c0_i32_1 = arith.constant 0 : i32
    return %c0_i32, %c0_i32_0 : i32, i32
  }
  func.func @transform_4(%arg0: i32) -> (i32, i32) {
    %c0_i32 = arith.constant 0 : i32
    %c0_i32_0 = arith.constant 0 : i32
    %c0_i32_1 = arith.constant 0 : i32
    return %c0_i32, %c0_i32_0 : i32, i32
  }
  func.func @transform_5(%arg0: i32) -> (i32, i32) {
    %c0_i32 = arith.constant 0 : i32
    %c0_i32_0 = arith.constant 0 : i32
    %c0_i32_1 = arith.constant 0 : i32
    return %c0_i32, %c0_i32_0 : i32, i32
  }
  func.func @transform_6(%arg0: i32) -> (i32, i32) {
    %c0_i32 = arith.constant 0 : i32
    %c0_i32_0 = arith.constant 0 : i32
    %c0_i32_1 = arith.constant 0 : i32
    return %c0_i32, %c0_i32_0 : i32, i32
  }
  func.func @transform_7(%arg0: i32) -> (i32, i32) {
    %c0_i32 = arith.constant 0 : i32
    %c0_i32_0 = arith.constant 0 : i32
    return %arg0, %c0_i32 : i32, i32
  }
}

</mosaic_0001>

<llo_original>
// kernel: mccformers_s1_forward.5
$region0: #{mccformers_s1_forward.5}
  #allocation0 [shape = 'u32[]', space=smem, size = 0x4, offset = 0x4, fixed_abs, tag = 'smem constant byte address 0x4 - core index']
  #allocation1 [shape = 'u32[72,128]{1,0:T(1,128)}', space=vmem, size = 0x9000, scoped, tag = 'internal scratch']
  %s0 = inlined_call_operand.vmem [shape: f32[2,32,4], index: 0, kind: input, shape index: {}]
  %s1 = inlined_call_operand.vmem [shape: bf16[4,32], index: 1, kind: input, shape index: {}]
  %s2 = inlined_call_operand.vmem [shape: f32[1,32], index: 2, kind: input, shape index: {}]
  %s3 = inlined_call_operand.vmem [shape: f32[32,32], index: 3, kind: input, shape index: {}]
  %s4 = inlined_call_operand.vmem [shape: f32[2,32,32], index: 4, kind: output, shape index: {}]
  %s5 = sld [smem:[#allocation0]]
  $region49: #{mccformers_s1_forward.5} parent=0
    _
  %s7 = ssub.s32 1, %s5
  %s8 = scalar_select 0, %s7, %s5
  loop: start=0, step=1, limit=4
  $region2: #{mccformers_s1_forward.5} parent=0 // loop_pre_header
    _
  $region3: #{mccformers_s1_forward.5} parent=0 // loop_header
    %s10 = sphi 0, %s14
    %p11 = scmp.ge.s32.totalorder %s10, 4
    %s20 = sphi 0, %s22
    %s23 = sphi 0, %s20
    %s24 = sphi 0, %s23
    %s40 = sphi 0, %s24
    %s44 = sphi 0, %s44
    %s46 = sphi 0, %s44
    %s47 = sphi 0, %s46
    %s61 = sphi 0, %s47
    %s65 = sphi 0, %s65
    %s67 = sphi 0, %s65
    %s68 = sphi 0, %s67
    %s82 = sphi 0, %s68
    %s86 = sphi 0, %s86
    %s88 = sphi 0, %s86
    %s89 = sphi 0, %s88
    %s103 = sphi 0, %s89
    %s109 = sphi 0, %s111
    %s112 = sphi 0, %s109
    %s113 = sphi 0, %s112
    %s129 = sphi 0, %s113
  $region4: #{mccformers_s1_forward.5} parent=0 // loop_header_branch
    %13 = sbr.rel (%p11) target = $region8
  $region5: #{mccformers_s1_forward.5} parent=0 // loop_body
    %s15 = ssub.s32 %s10, 1
    %s16 = ssub.s32 %s10, 2
    %s17 = sadd.s32 %s10, 1
    %s18 = ssub.s32 %s10, %s17
    %p19 = scmp.eq.s32.totalorder %s18, 0
    %s21 = sadd.s32 %s20, 1
    %s22 = scalar_select %p19, %s20, %s21
    %p25 = pneg %p19
    %p26 = scmp.eq.s32.totalorder %s10, 1
    %p27 = por %p25, %p26
    %p28 = scmp.ne.s32.totalorder %s20, %s23
    %p29 = scmp.eq.s32.totalorder %s10, 0
    %p30 = por %p28, %p29
    %p31 = scmp.ne.s32.totalorder %s20, %s23
    %p32 = scmp.eq.s32.totalorder %s15, 1
    %p33 = por %p31, %p32
    %p34 = scmp.ne.s32.totalorder %s23, %s24
    %p35 = scmp.eq.s32.totalorder %s15, 0
    %p36 = por %p34, %p35
    %p37 = scmp.ne.s32.totalorder %s23, %s24
    %p38 = scmp.eq.s32.totalorder %s16, 1
    %p39 = por %p37, %p38
    %p41 = scmp.ne.s32.totalorder %s24, %s40
    %p42 = scmp.eq.s32.totalorder %s16, 0
    %p43 = por %p41, %p42
    %s45 = sadd.s32 %s44, 1
    %p48 = scmp.eq.s32.totalorder %s10, 1
    %p49 = scmp.ne.s32.totalorder %s44, %s46
    %p50 = scmp.eq.s32.totalorder %s10, 0
    %p51 = por %p49, %p50
    %p52 = scmp.ne.s32.totalorder %s44, %s46
    %p53 = scmp.eq.s32.totalorder %s15, 1
    %p54 = por %p52, %p53
    %p55 = scmp.ne.s32.totalorder %s46, %s47
    %p56 = scmp.eq.s32.totalorder %s15, 0
    %p57 = por %p55, %p56
    %p58 = scmp.ne.s32.totalorder %s46, %s47
    %p59 = scmp.eq.s32.totalorder %s16, 1
    %p60 = por %p58, %p59
    %p62 = scmp.ne.s32.totalorder %s47, %s61
    %p63 = scmp.eq.s32.totalorder %s16, 0
    %p64 = por %p62, %p63
    %s66 = sadd.s32 %s65, 1
    %p69 = scmp.eq.s32.totalorder %s10, 1
    %p70 = scmp.ne.s32.totalorder %s65, %s67
    %p71 = scmp.eq.s32.totalorder %s10, 0
    %p72 = por %p70, %p71
    %p73 = scmp.ne.s32.totalorder %s65, %s67
    %p74 = scmp.eq.s32.totalorder %s15, 1
    %p75 = por %p73, %p74
    %p76 = scmp.ne.s32.totalorder %s67, %s68
    %p77 = scmp.eq.s32.totalorder %s15, 0
    %p78 = por %p76, %p77
    %p79 = scmp.ne.s32.totalorder %s67, %s68
    %p80 = scmp.eq.s32.totalorder %s16, 1
    %p81 = por %p79, %p80
    %p83 = scmp.ne.s32.totalorder %s68, %s82
    %p84 = scmp.eq.s32.totalorder %s16, 0
    %p85 = por %p83, %p84
    %s87 = sadd.s32 %s86, 1
    %p90 = scmp.eq.s32.totalorder %s10, 1
    %p91 = scmp.ne.s32.totalorder %s86, %s88
    %p92 = scmp.eq.s32.totalorder %s10, 0
    %p93 = por %p91, %p92
    %p94 = scmp.ne.s32.totalorder %s86, %s88
    %p95 = scmp.eq.s32.totalorder %s15, 1
    %p96 = por %p94, %p95
    %p97 = scmp.ne.s32.totalorder %s88, %s89
    %p98 = scmp.eq.s32.totalorder %s15, 0
    %p99 = por %p97, %p98
    %p100 = scmp.ne.s32.totalorder %s88, %s89
    %p101 = scmp.eq.s32.totalorder %s16, 1
    %p102 = por %p100, %p101
    %p104 = scmp.ne.s32.totalorder %s89, %s103
    %p105 = scmp.eq.s32.totalorder %s16, 0
    %p106 = por %p104, %p105
    %s107 = ssub.s32 %s10, %s17
    %p108 = scmp.eq.s32.totalorder %s107, 0
    %s110 = sadd.s32 %s109, 1
    %s111 = scalar_select %p108, %s109, %s110
    %p114 = pneg %p108
    %p115 = scmp.eq.s32.totalorder %s10, 1
    %p116 = por %p114, %p115
    %p117 = scmp.ne.s32.totalorder %s109, %s112
    %p118 = scmp.eq.s32.totalorder %s10, 0
    %p119 = por %p117, %p118
    %p120 = scmp.ne.s32.totalorder %s109, %s112
    %p121 = scmp.eq.s32.totalorder %s15, 1
    %p122 = por %p120, %p121
    %p123 = scmp.ne.s32.totalorder %s112, %s113
    %p124 = scmp.eq.s32.totalorder %s15, 0
    %p125 = por %p123, %p124
    %p126 = scmp.ne.s32.totalorder %s112, %s113
    %p127 = scmp.eq.s32.totalorder %s16, 1
    %p128 = por %p126, %p127
    %p130 = scmp.ne.s32.totalorder %s113, %s129
    %p131 = scmp.eq.s32.totalorder %s16, 0
    %p132 = por %p130, %p131
    %p133 = scmp.le.s32.totalorder 1, %s10
    %p134 = scmp.lt.s32.totalorder %s10, 3
    %p135 = pnand %p133, %p134
    %p136 = pneg %p135
    // Predicated region
    $region9: #{mccformers_s1_forward.5} parent=5 // pred_check
      _
    $region10: #{mccformers_s1_forward.5} parent=5 // pred_check_branch
      %138 = sbr.rel (%p135) target = $region12
    $region11: #{mccformers_s1_forward.5} parent=5 // pred_region
      %s139 = ssub.s32 %s10, 1
      // Predicated region
      $region13: #{mccformers_s1_forward.5} parent=11 // pred_check
        %p140 = pneg %p57
      $region14: #{mccformers_s1_forward.5} parent=11 // pred_check_branch
        %142 = sbr.rel (%p140) target = $region16
      $region15: #{mccformers_s1_forward.5} parent=11 // pred_region
        _
      $region16: #{mccformers_s1_forward.5} parent=11 // pred_fallthru
        _
      // Predicated region
      $region17: #{mccformers_s1_forward.5} parent=11 // pred_check
        %p143 = pneg %p78
      $region18: #{mccformers_s1_forward.5} parent=11 // pred_check_branch
        %145 = sbr.rel (%p143) target = $region20
      $region19: #{mccformers_s1_forward.5} parent=11 // pred_region
        _
      $region20: #{mccformers_s1_forward.5} parent=11 // pred_fallthru
        _
      // Predicated region
      $region21: #{mccformers_s1_forward.5} parent=11 // pred_check
        %p146 = pneg %p99
      $region22: #{mccformers_s1_forward.5} parent=11 // pred_check_branch
        %148 = sbr.rel (%p146) target = $region24
      $region23: #{mccformers_s1_forward.5} parent=11 // pred_region
        _
      $region24: #{mccformers_s1_forward.5} parent=11 // pred_fallthru
        _
    $region12: #{mccformers_s1_forward.5} parent=5 // pred_fallthru
      _
    %p149 = scmp.lt.s32.totalorder %s10, 2
    // Predicated region
    $region25: #{mccformers_s1_forward.5} parent=5 // pred_check
      %p150 = pneg %p149
    $region26: #{mccformers_s1_forward.5} parent=5 // pred_check_branch
      %152 = sbr.rel (%p150) target = $region28
    $region27: #{mccformers_s1_forward.5} parent=5 // pred_region
      // Predicated region
      $region29: #{mccformers_s1_forward.5} parent=27 // pred_check
        %p153 = pneg %p30
      $region30: #{mccformers_s1_forward.5} parent=27 // pred_check_branch
        %155 = sbr.rel (%p153) target = $region32
      $region31: #{mccformers_s1_forward.5} parent=27 // pred_region
        %p156 = scmp.lt.s32.totalorder %s10, 1
        %s157 = scalar_select %p156, %s10, 1
        %s158 = smul.addr %s157, 4
        %s159 = smul.addr %s158, 8
        %s160 = scalar_lea.vmem %s0, %s159
      $region32: #{mccformers_s1_forward.5} parent=27 // pred_fallthru
        _
    $region28: #{mccformers_s1_forward.5} parent=5 // pred_fallthru
      _
    %p161 = scmp.le.s32.totalorder 1, %s10
    %p162 = scmp.lt.s32.totalorder %s10, 3
    %p163 = pnand %p161, %p162
    %p164 = pneg %p163
    // Predicated region
    $region33: #{mccformers_s1_forward.5} parent=5 // pred_check
      _
    $region34: #{mccformers_s1_forward.5} parent=5 // pred_check_branch
      %166 = sbr.rel (%p163) target = $region36
    $region35: #{mccformers_s1_forward.5} parent=5 // pred_region
      %s167 = ssub.s32 %s10, 1
      %p168 = scmp.lt.s32.totalorder %s15, 1
      %s169 = scalar_select %p168, %s15, 1
      %s170 = smul.addr %s169, 4
      %s171 = smul.addr %s170, 8
      %s172 = scalar_lea.vmem %s0, %s171
      %p173 = pneg %p36
      %p174 = pneg %p33
      %p175 = pneg %p57
      %p176 = pneg %p54
      %p177 = pneg %p78
      %p178 = pneg %p75
      %p179 = pneg %p99
      %p180 = pneg %p96
      %p181 = pneg %p125
      %p182 = pneg %p122
      %p183 = scmp.lt.s32.totalorder %s15, 1
      %s184 = scalar_select %p183, %s15, 1
      %s185 = smul.addr %s184, 4
      %s186 = smul.addr %s185, 8
      %s187 = scalar_lea.vmem %s4, %s186
      %p188 = scmp.lt.s32.totalorder %s15, 1
      %s189 = scalar_select %p188, %s15, 1
      %s190 = smul.addr %s189, 4
      %s191 = smul.addr %s190, 8
      %s192 = scalar_lea.vmem %s0, %s191
      %p193 = scmp.lt.s32.totalorder %s15, 1
      %s194 = scalar_select %p193, %s15, 1
      %s195 = smul.addr %s194, 4
      %s196 = smul.addr %s195, 8
      %s197 = scalar_lea.vmem %s4, %s196
      %v199 = vld [vmem:[%s192] sm:$0xff]
      %v200 = vld [vmem:[%s192 + $0x8] sm:$0xff]
      %v201 = vld [vmem:[%s192 + $0x10] sm:$0xff]
      %v202 = vld [vmem:[%s192 + $0x18] sm:$0xff]
      %v203 = vpack.c.bf16 %v200, %v199
      %v204 = vpack.c.bf16 %v202, %v201
      %v205 = vld [vmem:[%s1] sm:$0x3]
      %v206 = vld [vmem:[%s2] sm:$0x1]
      %v208 = vperm.slane %v206, 0
      %vm210 = vcmask 31744
      %v212 = vsel %vm210, %v203, 0
      %v215 = vsel %vm210, %v204, 0
      %vm217 = vcmask 1041408
      %v219 = vsel %vm217, %v205, 0
      %221 = vmatpush.bf16.msra.mxu0 0
      %222 = vmatpush.bf16.msra.mxu0 0
      %223 = vmatpush.bf16.msra.mxu0 0
      %224 = vmatpush.bf16.msra.mxu0 0
      %225 = vmatpush.bf16.msra.mxu0 0
      %226 = vmatpush.bf16.msra.mxu0 0
      %227 = vmatpush.bf16.msra.mxu0 0
      %228 = vmatpush.bf16.msra.mxu0 %v219
      %229 = vmatmul.bf16.gmra.mxu0 %v212
      %v230 = vpop.f32.mrf.mxu0
      %v231 = vadd.f32 %v208, %v230
      %v232 = vpop.f32.mrf.mxu0
      %v233 = vadd.f32 %v208, %v232
      %234 = vmatmul.bf16.gmra.mxu0 %v215
      %v235 = vpop.f32.mrf.mxu0
      %v236 = vadd.f32 %v208, %v235
      %v237 = vpop.f32.mrf.mxu0
      %v238 = vadd.f32 %v208, %v237
      %239 = vdwg.mxu0
      %v240 = vld [vmem:[%s3] sm:$0xff]
      %v241 = vld [vmem:[%s3 + $0x8] sm:$0xff]
      %v242 = vld [vmem:[%s3 + $0x10] sm:$0xff]
      %v243 = vld [vmem:[%s3 + $0x18] sm:$0xff]
      %v244 = vadd.f32 %v231, %v240
      %v245 = vadd.f32 %v233, %v241
      %v246 = vadd.f32 %v236, %v242
      %v247 = vadd.f32 %v238, %v243
      %vm248 = vcmask 261120
      %249 = vst.msk [vmem:[%s197] sm:$0xff] %vm248, %v244
      %250 = vst.msk [vmem:[%s197 + $0x8] sm:$0xff] %vm248, %v245
      %251 = vst.msk [vmem:[%s197 + $0x10] sm:$0xff] %vm248, %v246
      %252 = vst.msk [vmem:[%s197 + $0x18] sm:$0xff] %vm248, %v247
      %p253 = scmp.lt.s32.totalorder %s15, 1
      %s254 = scalar_select %p253, %s15, 1
      %s255 = smul.addr %s254, 4
      %s256 = smul.addr %s255, 8
      %s257 = scalar_lea.vmem %s4, %s256
      // Predicated region
      $region37: #{mccformers_s1_forward.5} parent=35 // pred_check
        %p258 = pneg %p122
      $region38: #{mccformers_s1_forward.5} parent=35 // pred_check_branch
        %260 = sbr.rel (%p258) target = $region40
      $region39: #{mccformers_s1_forward.5} parent=35 // pred_region
        _
      $region40: #{mccformers_s1_forward.5} parent=35 // pred_fallthru
        _
    $region36: #{mccformers_s1_forward.5} parent=5 // pred_fallthru
      _
    %p261 = scmp.le.s32.totalorder 2, %s10
    // Predicated region
    $region41: #{mccformers_s1_forward.5} parent=5 // pred_check
      %p262 = pneg %p261
    $region42: #{mccformers_s1_forward.5} parent=5 // pred_check_branch
      %264 = sbr.rel (%p262) target = $region44
    $region43: #{mccformers_s1_forward.5} parent=5 // pred_region
      %s265 = ssub.s32 %s10, 2
      // Predicated region
      $region45: #{mccformers_s1_forward.5} parent=43 // pred_check
        %p266 = pneg %p128
      $region46: #{mccformers_s1_forward.5} parent=43 // pred_check_branch
        %268 = sbr.rel (%p266) target = $region48
      $region47: #{mccformers_s1_forward.5} parent=43 // pred_region
        %p269 = scmp.lt.s32.totalorder %s16, 1
        %s270 = scalar_select %p269, %s16, 1
        %s271 = smul.addr %s270, 4
        %s272 = smul.addr %s271, 8
        %s273 = scalar_lea.vmem %s4, %s272
      $region48: #{mccformers_s1_forward.5} parent=43 // pred_fallthru
        _
    $region44: #{mccformers_s1_forward.5} parent=5 // pred_fallthru
      _
  $region6: #{mccformers_s1_forward.5} parent=0 // loop_footer
    %s14 = sadd.s32 1, %s10
  $region7: #{mccformers_s1_forward.5} parent=0 // loop_footer_branch
    %9 = sbr.rel target = $region3
  $region8: #{mccformers_s1_forward.5} parent=0 // loop_exit
    _

// kernel: mccformers_s1_forward.7
$region0: #{mccformers_s1_forward.7}
  #allocation0 [shape = 'u32[]', space=smem, size = 0x4, offset = 0x4, fixed_abs, tag = 'smem constant byte address 0x4 - core index']
  #allocation1 [shape = 'u32[72,128]{1,0:T(1,128)}', space=vmem, size = 0x9000, scoped, tag = 'internal scratch']
  %s0 = inlined_call_operand.vmem [shape: f32[64,32], index: 0, kind: input, shape index: {}]
  %s1 = inlined_call_operand.vmem [shape: bf16[32,64], index: 1, kind: input, shape index: {}]
  %s2 = inlined_call_operand.vmem [shape: f32[1,64], index: 2, kind: input, shape index: {}]
  %s3 = inlined_call_operand.vmem [shape: bf16[64,32], index: 3, kind: input, shape index: {}]
  %s4 = inlined_call_operand.vmem [shape: f32[1,32], index: 4, kind: input, shape index: {}]
  %s5 = inlined_call_operand.vmem [shape: f32[1,32], index: 5, kind: input, shape index: {}]
  %s6 = inlined_call_operand.vmem [shape: f32[1,32], index: 6, kind: input, shape index: {}]
  %s7 = inlined_call_operand.vmem [shape: f32[64,32], index: 7, kind: output, shape index: {}]
  %s8 = sld [smem:[#allocation0]]
  $region38: #{mccformers_s1_forward.7} parent=0
    _
  %s10 = ssub.s32 1, %s8
  %s11 = scalar_select 0, %s10, %s8
  // Predicated region
  $region2: #{mccformers_s1_forward.7} parent=0 // pred_check
    _
  $region3: #{mccformers_s1_forward.7} parent=0 // pred_check_branch
    %13 = sbr.rel (0) target = $region5
  $region4: #{mccformers_s1_forward.7} parent=0 // pred_region
    _
  $region5: #{mccformers_s1_forward.7} parent=0 // pred_fallthru
    _
  // Predicated region
  $region6: #{mccformers_s1_forward.7} parent=0 // pred_check
    _
  $region7: #{mccformers_s1_forward.7} parent=0 // pred_check_branch
    %15 = sbr.rel (0) target = $region9
  $region8: #{mccformers_s1_forward.7} parent=0 // pred_region
    _
  $region9: #{mccformers_s1_forward.7} parent=0 // pred_fallthru
    _
  // Predicated region
  $region10: #{mccformers_s1_forward.7} parent=0 // pred_check
    _
  $region11: #{mccformers_s1_forward.7} parent=0 // pred_check_branch
    %17 = sbr.rel (0) target = $region13
  $region12: #{mccformers_s1_forward.7} parent=0 // pred_region
    _
  $region13: #{mccformers_s1_forward.7} parent=0 // pred_fallthru
    _
  // Predicated region
  $region14: #{mccformers_s1_forward.7} parent=0 // pred_check
    _
  $region15: #{mccformers_s1_forward.7} parent=0 // pred_check_branch
    %19 = sbr.rel (0) target = $region17
  $region16: #{mccformers_s1_forward.7} parent=0 // pred_region
    _
  $region17: #{mccformers_s1_forward.7} parent=0 // pred_fallthru
    _
  // Predicated region
  $region18: #{mccformers_s1_forward.7} parent=0 // pred_check
    _
  $region19: #{mccformers_s1_forward.7} parent=0 // pred_check_branch
    %21 = sbr.rel (0) target = $region21
  $region20: #{mccformers_s1_forward.7} parent=0 // pred_region
    _
  $region21: #{mccformers_s1_forward.7} parent=0 // pred_fallthru
    _
  // Predicated region
  $region22: #{mccformers_s1_forward.7} parent=0 // pred_check
    _
  $region23: #{mccformers_s1_forward.7} parent=0 // pred_check_branch
    %23 = sbr.rel (0) target = $region25
  $region24: #{mccformers_s1_forward.7} parent=0 // pred_region
    _
  $region25: #{mccformers_s1_forward.7} parent=0 // pred_fallthru
    _
  // Predicated region
  $region26: #{mccformers_s1_forward.7} parent=0 // pred_check
    _
  $region27: #{mccformers_s1_forward.7} parent=0 // pred_check_branch
    %25 = sbr.rel (0) target = $region29
  $region28: #{mccformers_s1_forward.7} parent=0 // pred_region
    _
  $region29: #{mccformers_s1_forward.7} parent=0 // pred_fallthru
    _
  %v27 = vld [vmem:[%s0] sm:$0xff]
  %v28 = vld [vmem:[%s0 + $0x8] sm:$0xff]
  %v29 = vld [vmem:[%s0 + $0x10] sm:$0xff]
  %v30 = vld [vmem:[%s0 + $0x18] sm:$0xff]
  %v31 = vld [vmem:[%s0 + $0x20] sm:$0xff]
  %v32 = vld [vmem:[%s0 + $0x28] sm:$0xff]
  %v33 = vld [vmem:[%s0 + $0x30] sm:$0xff]
  %v34 = vld [vmem:[%s0 + $0x38] sm:$0xff]
  %v35 = vpack.c.bf16 %v28, %v27
  %v36 = vpack.c.bf16 %v30, %v29
  %v37 = vpack.c.bf16 %v32, %v31
  %v38 = vpack.c.bf16 %v34, %v33
  %v39 = vld [vmem:[%s1] sm:$0xf]
  %v40 = vld [vmem:[%s1 + $0x4] sm:$0xf]
  %v41 = vld [vmem:[%s1 + $0x8] sm:$0xf]
  %v42 = vld [vmem:[%s1 + $0xc] sm:$0xf]
  %v43 = vld [vmem:[%s2] sm:$0x1]
  %v45 = vperm.slane %v43, 0
  %v51 = vunpack.c.l.b16 %v39
  %v52 = vunpack.c.l.b16 %v40
  %v53 = vunpack.c.l.b16 %v41
  %v54 = vunpack.c.l.b16 %v42
  %v55 = vpack.c.b16 %v52, %v51
  %v56 = vpack.c.b16 %v54, %v53
  %vm59 = vcmask 261120
  %v61 = vsel %vm59, %v35, 0
  %v64 = vsel %vm59, %v36, 0
  %v67 = vsel %vm59, %v37, 0
  %v70 = vsel %vm59, %v38, 0
  %72 = vmatpush.bf16.msra.mxu0 0
  %73 = vmatpush.bf16.msra.mxu0 0
  %74 = vmatpush.bf16.msra.mxu0 0
  %75 = vmatpush.bf16.msra.mxu0 0
  %76 = vmatpush.bf16.msra.mxu0 0
  %77 = vmatpush.bf16.msra.mxu0 0
  %78 = vmatpush.bf16.msra.mxu0 %v56
  %79 = vmatpush.bf16.msra.mxu0 %v55
  %80 = vmatmul.bf16.gmra.mxu0 %v61
  %v81 = vpop.f32.mrf.mxu0
  %v82 = vadd.f32 %v45, %v81
  %v83 = vpop.f32.mrf.mxu0
  %v84 = vadd.f32 %v45, %v83
  %85 = vmatmul.bf16.gmra.mxu0 %v64
  %v86 = vpop.f32.mrf.mxu0
  %v87 = vadd.f32 %v45, %v86
  %v88 = vpop.f32.mrf.mxu0
  %v89 = vadd.f32 %v45, %v88
  %90 = vmatmul.bf16.gmra.mxu0 %v67
  %v91 = vpop.f32.mrf.mxu0
  %v92 = vadd.f32 %v45, %v91
  %v93 = vpop.f32.mrf.mxu0
  %v94 = vadd.f32 %v45, %v93
  %95 = vmatmul.bf16.gmra.mxu0 %v70
  %v96 = vpop.f32.mrf.mxu0
  %v97 = vadd.f32 %v45, %v96
  %v98 = vpop.f32.mrf.mxu0
  %v99 = vadd.f32 %v45, %v98
  %100 = vdwg.mxu0
  %v101 = vmax.f32 %v82, 0.0
  %v102 = vmax.f32 %v84, 0.0
  %v103 = vmax.f32 %v87, 0.0
  %v104 = vmax.f32 %v89, 0.0
  %v105 = vmax.f32 %v92, 0.0
  %v106 = vmax.f32 %v94, 0.0
  %v107 = vmax.f32 %v97, 0.0
  %v108 = vmax.f32 %v99, 0.0
  %v109 = vpack.c.bf16 %v102, %v101
  %v110 = vpack.c.bf16 %v104, %v103
  %v111 = vpack.c.bf16 %v106, %v105
  %v112 = vpack.c.bf16 %v108, %v107
  %v113 = vld [vmem:[%s3] sm:$0xf]
  %v114 = vld [vmem:[%s3 + $0x4] sm:$0xf]
  %v115 = vld [vmem:[%s3 + $0x8] sm:$0xf]
  %v116 = vld [vmem:[%s3 + $0xc] sm:$0xf]
  %v117 = vld [vmem:[%s3 + $0x10] sm:$0xf]
  %v118 = vld [vmem:[%s3 + $0x14] sm:$0xf]
  %v119 = vld [vmem:[%s3 + $0x18] sm:$0xf]
  %v120 = vld [vmem:[%s3 + $0x1c] sm:$0xf]
  %v121 = vld [vmem:[%s4] sm:$0x1]
  %v123 = vperm.slane %v121, 0
  %v133 = vunpack.c.l.b16 %v113
  %v134 = vunpack.c.l.b16 %v114
  %v135 = vunpack.c.l.b16 %v115
  %v136 = vunpack.c.l.b16 %v116
  %v137 = vunpack.c.l.b16 %v117
  %v138 = vunpack.c.l.b16 %v118
  %v139 = vunpack.c.l.b16 %v119
  %v140 = vunpack.c.l.b16 %v120
  %v141 = vpack.c.b16 %v134, %v133
  %v142 = vpack.c.b16 %v136, %v135
  %v143 = vpack.c.b16 %v138, %v137
  %v144 = vpack.c.b16 %v140, %v139
  %vm149 = vcmask 523264
  %v151 = vsel %vm149, %v109, 0
  %v154 = vsel %vm149, %v110, 0
  %v157 = vsel %vm149, %v111, 0
  %v160 = vsel %vm149, %v112, 0
  %162 = vmatpush.bf16.msra.mxu0 0
  %163 = vmatpush.bf16.msra.mxu0 0
  %164 = vmatpush.bf16.msra.mxu0 0
  %165 = vmatpush.bf16.msra.mxu0 0
  %166 = vmatpush.bf16.msra.mxu0 %v144
  %167 = vmatpush.bf16.msra.mxu0 %v143
  %168 = vmatpush.bf16.msra.mxu0 %v142
  %169 = vmatpush.bf16.msra.mxu0 %v141
  %170 = vmatmul.bf16.gmra.mxu0 %v151
  %v171 = vpop.f32.mrf.mxu0
  %v172 = vadd.f32 %v123, %v171
  %v173 = vpop.f32.mrf.mxu0
  %v174 = vadd.f32 %v123, %v173
  %175 = vmatmul.bf16.gmra.mxu0 %v154
  %v176 = vpop.f32.mrf.mxu0
  %v177 = vadd.f32 %v123, %v176
  %v178 = vpop.f32.mrf.mxu0
  %v179 = vadd.f32 %v123, %v178
  %180 = vmatmul.bf16.gmra.mxu0 %v157
  %v181 = vpop.f32.mrf.mxu0
  %v182 = vadd.f32 %v123, %v181
  %v183 = vpop.f32.mrf.mxu0
  %v184 = vadd.f32 %v123, %v183
  %185 = vmatmul.bf16.gmra.mxu0 %v160
  %v186 = vpop.f32.mrf.mxu0
  %v187 = vadd.f32 %v123, %v186
  %v188 = vpop.f32.mrf.mxu0
  %v189 = vadd.f32 %v123, %v188
  %190 = vdwg.mxu0
  %v191 = vadd.f32 %v27, %v172
  %v192 = vadd.f32 %v28, %v174
  %v193 = vadd.f32 %v29, %v177
  %v194 = vadd.f32 %v30, %v179
  %v195 = vadd.f32 %v31, %v182
  %v196 = vadd.f32 %v32, %v184
  %v197 = vadd.f32 %v33, %v187
  %v198 = vadd.f32 %v34, %v189
  %v199 = vsel %vm59, %v191, 0.0
  %200 = vadd.xlane.f32.xlu0 %v199
  %v201 = vpop.xlane.xlu0 %200
  %v202 = vsel %vm59, %v192, 0.0
  %203 = vadd.xlane.f32.xlu0 %v202
  %v204 = vpop.xlane.xlu0 %203
  %v205 = vsel %vm59, %v193, 0.0
  %206 = vadd.xlane.f32.xlu0 %v205
  %v207 = vpop.xlane.xlu0 %206
  %v208 = vsel %vm59, %v194, 0.0
  %209 = vadd.xlane.f32.xlu0 %v208
  %v210 = vpop.xlane.xlu0 %209
  %v211 = vsel %vm59, %v195, 0.0
  %212 = vadd.xlane.f32.xlu0 %v211
  %v213 = vpop.xlane.xlu0 %212
  %v214 = vsel %vm59, %v196, 0.0
  %215 = vadd.xlane.f32.xlu0 %v214
  %v216 = vpop.xlane.xlu0 %215
  %v217 = vsel %vm59, %v197, 0.0
  %218 = vadd.xlane.f32.xlu0 %v217
  %v219 = vpop.xlane.xlu0 %218
  %v220 = vsel %vm59, %v198, 0.0
  %221 = vadd.xlane.f32.xlu0 %v220
  %v222 = vpop.xlane.xlu0 %221
  %v223 = vrcp.pop 32.0
  %v224 = vmul.f32 32.0, %v223
  %v225 = vsub.f32 1.0, %v224
  %v226 = vmul.f32 %v223, %v225
  %v227 = vadd.f32 %v223, %v226
  %vm228 = vweird.f32 %v223
  %v229 = vsel %vm228, %v223, %v227
  %v230 = vmul.f32 %v201, %v229
  %v231 = vmul.f32 %v204, %v229
  %v232 = vmul.f32 %v207, %v229
  %v233 = vmul.f32 %v210, %v229
  %v234 = vmul.f32 %v213, %v229
  %v235 = vmul.f32 %v216, %v229
  %v236 = vmul.f32 %v219, %v229
  %v237 = vmul.f32 %v222, %v229
  %v238 = vsub.f32 %v191, %v230
  %v239 = vsub.f32 %v192, %v231
  %v240 = vsub.f32 %v193, %v232
  %v241 = vsub.f32 %v194, %v233
  %v242 = vsub.f32 %v195, %v234
  %v243 = vsub.f32 %v196, %v235
  %v244 = vsub.f32 %v197, %v236
  %v245 = vsub.f32 %v198, %v237
  %v246 = vmul.f32 %v238, %v238
  %v247 = vmul.f32 %v239, %v239
  %v248 = vmul.f32 %v240, %v240
  %v249 = vmul.f32 %v241, %v241
  %v250 = vmul.f32 %v242, %v242
  %v251 = vmul.f32 %v243, %v243
  %v252 = vmul.f32 %v244, %v244
  %v253 = vmul.f32 %v245, %v245
  %v254 = vsel %vm59, %v246, 0.0
  %255 = vadd.xlane.f32.xlu0 %v254
  %v256 = vpop.xlane.xlu0 %255
  %v257 = vsel %vm59, %v247, 0.0
  %258 = vadd.xlane.f32.xlu0 %v257
  %v259 = vpop.xlane.xlu0 %258
  %v260 = vsel %vm59, %v248, 0.0
  %261 = vadd.xlane.f32.xlu0 %v260
  %v262 = vpop.xlane.xlu0 %261
  %v263 = vsel %vm59, %v249, 0.0
  %264 = vadd.xlane.f32.xlu0 %v263
  %v265 = vpop.xlane.xlu0 %264
  %v266 = vsel %vm59, %v250, 0.0
  %267 = vadd.xlane.f32.xlu0 %v266
  %v268 = vpop.xlane.xlu0 %267
  %v269 = vsel %vm59, %v251, 0.0
  %270 = vadd.xlane.f32.xlu0 %v269
  %v271 = vpop.xlane.xlu0 %270
  %v272 = vsel %vm59, %v252, 0.0
  %273 = vadd.xlane.f32.xlu0 %v272
  %v274 = vpop.xlane.xlu0 %273
  %v275 = vsel %vm59, %v253, 0.0
  %276 = vadd.xlane.f32.xlu0 %v275
  %v277 = vpop.xlane.xlu0 %276
  %v278 = vmul.f32 %v256, %v229
  %v279 = vmul.f32 %v259, %v229
  %v280 = vmul.f32 %v262, %v229
  %v281 = vmul.f32 %v265, %v229
  %v282 = vmul.f32 %v268, %v229
  %v283 = vmul.f32 %v271, %v229
  %v284 = vmul.f32 %v274, %v229
  %v285 = vmul.f32 %v277, %v229
  %v286 = vadd.f32 %v278, 1e-05
  %v287 = vadd.f32 %v279, 1e-05
  %v288 = vadd.f32 %v280, 1e-05
  %v289 = vadd.f32 %v281, 1e-05
  %v290 = vadd.f32 %v282, 1e-05
  %v291 = vadd.f32 %v283, 1e-05
  %v292 = vadd.f32 %v284, 1e-05
  %v293 = vadd.f32 %v285, 1e-05
  %v294 = vrsqrt.pop %v286
  %v295 = vmul.f32 %v294, %v286
  %v296 = vmul.f32 %v295, %v294
  %v297 = vmul.f32 0.5, %v296
  %v298 = vsub.f32 1.5, %v297
  %v299 = vmul.f32 %v294, %v298
  %vm300 = vweird.f32 %v286
  %vm301 = vweird.f32 %v294
  %vm302 = vmor %vm300, %vm301
  %v303 = vsel %vm302, %v294, %v299
  %v304 = vrsqrt.pop %v287
  %v305 = vmul.f32 %v304, %v287
  %v306 = vmul.f32 %v305, %v304
  %v307 = vmul.f32 0.5, %v306
  %v308 = vsub.f32 1.5, %v307
  %v309 = vmul.f32 %v304, %v308
  %vm310 = vweird.f32 %v287
  %vm311 = vweird.f32 %v304
  %vm312 = vmor %vm310, %vm311
  %v313 = vsel %vm312, %v304, %v309
  %v314 = vrsqrt.pop %v288
  %v315 = vmul.f32 %v314, %v288
  %v316 = vmul.f32 %v315, %v314
  %v317 = vmul.f32 0.5, %v316
  %v318 = vsub.f32 1.5, %v317
  %v319 = vmul.f32 %v314, %v318
  %vm320 = vweird.f32 %v288
  %vm321 = vweird.f32 %v314
  %vm322 = vmor %vm320, %vm321
  %v323 = vsel %vm322, %v314, %v319
  %v324 = vrsqrt.pop %v289
  %v325 = vmul.f32 %v324, %v289
  %v326 = vmul.f32 %v325, %v324
  %v327 = vmul.f32 0.5, %v326
  %v328 = vsub.f32 1.5, %v327
  %v329 = vmul.f32 %v324, %v328
  %vm330 = vweird.f32 %v289
  %vm331 = vweird.f32 %v324
  %vm332 = vmor %vm330, %vm331
  %v333 = vsel %vm332, %v324, %v329
  %v334 = vrsqrt.pop %v290
  %v335 = vmul.f32 %v334, %v290
  %v336 = vmul.f32 %v335, %v334
  %v337 = vmul.f32 0.5, %v336
  %v338 = vsub.f32 1.5, %v337
  %v339 = vmul.f32 %v334, %v338
  %vm340 = vweird.f32 %v290
  %vm341 = vweird.f32 %v334
  %vm342 = vmor %vm340, %vm341
  %v343 = vsel %vm342, %v334, %v339
  %v344 = vrsqrt.pop %v291
  %v345 = vmul.f32 %v344, %v291
  %v346 = vmul.f32 %v345, %v344
  %v347 = vmul.f32 0.5, %v346
  %v348 = vsub.f32 1.5, %v347
  %v349 = vmul.f32 %v344, %v348
  %vm350 = vweird.f32 %v291
  %vm351 = vweird.f32 %v344
  %vm352 = vmor %vm350, %vm351
  %v353 = vsel %vm352, %v344, %v349
  %v354 = vrsqrt.pop %v292
  %v355 = vmul.f32 %v354, %v292
  %v356 = vmul.f32 %v355, %v354
  %v357 = vmul.f32 0.5, %v356
  %v358 = vsub.f32 1.5, %v357
  %v359 = vmul.f32 %v354, %v358
  %vm360 = vweird.f32 %v292
  %vm361 = vweird.f32 %v354
  %vm362 = vmor %vm360, %vm361
  %v363 = vsel %vm362, %v354, %v359
  %v364 = vrsqrt.pop %v293
  %v365 = vmul.f32 %v364, %v293
  %v366 = vmul.f32 %v365, %v364
  %v367 = vmul.f32 0.5, %v366
  %v368 = vsub.f32 1.5, %v367
  %v369 = vmul.f32 %v364, %v368
  %vm370 = vweird.f32 %v293
  %vm371 = vweird.f32 %v364
  %vm372 = vmor %vm370, %vm371
  %v373 = vsel %vm372, %v364, %v369
  %v374 = vmul.f32 %v238, %v303
  %v375 = vmul.f32 %v239, %v313
  %v376 = vmul.f32 %v240, %v323
  %v377 = vmul.f32 %v241, %v333
  %v378 = vmul.f32 %v242, %v343
  %v379 = vmul.f32 %v243, %v353
  %v380 = vmul.f32 %v244, %v363
  %v381 = vmul.f32 %v245, %v373
  %v382 = vld [vmem:[%s5] sm:$0x1]
  %v384 = vperm.slane %v382, 0
  %v386 = vmul.f32 %v374, %v384
  %v387 = vmul.f32 %v375, %v384
  %v388 = vmul.f32 %v376, %v384
  %v389 = vmul.f32 %v377, %v384
  %v390 = vmul.f32 %v378, %v384
  %v391 = vmul.f32 %v379, %v384
  %v392 = vmul.f32 %v380, %v384
  %v393 = vmul.f32 %v381, %v384
  %v394 = vld [vmem:[%s6] sm:$0x1]
  %v396 = vperm.slane %v394, 0
  %v398 = vadd.f32 %v386, %v396
  %v399 = vadd.f32 %v387, %v396
  %v400 = vadd.f32 %v388, %v396
  %v401 = vadd.f32 %v389, %v396
  %v402 = vadd.f32 %v390, %v396
  %v403 = vadd.f32 %v391, %v396
  %v404 = vadd.f32 %v392, %v396
  %v405 = vadd.f32 %v393, %v396
  %406 = vst.msk [vmem:[%s7] sm:$0xff] %vm59, %v398
  %407 = vst.msk [vmem:[%s7 + $0x8] sm:$0xff] %vm59, %v399
  %408 = vst.msk [vmem:[%s7 + $0x10] sm:$0xff] %vm59, %v400
  %409 = vst.msk [vmem:[%s7 + $0x18] sm:$0xff] %vm59, %v401
  %410 = vst.msk [vmem:[%s7 + $0x20] sm:$0xff] %vm59, %v402
  %411 = vst.msk [vmem:[%s7 + $0x28] sm:$0xff] %vm59, %v403
  %412 = vst.msk [vmem:[%s7 + $0x30] sm:$0xff] %vm59, %v404
  %413 = vst.msk [vmem:[%s7 + $0x38] sm:$0xff] %vm59, %v405
  // Predicated region
  $region30: #{mccformers_s1_forward.7} parent=0 // pred_check
    _
  $region31: #{mccformers_s1_forward.7} parent=0 // pred_check_branch
    %415 = sbr.rel (0) target = $region33
  $region32: #{mccformers_s1_forward.7} parent=0 // pred_region
    _
  $region33: #{mccformers_s1_forward.7} parent=0 // pred_fallthru
    _
  // Predicated region
  $region34: #{mccformers_s1_forward.7} parent=0 // pred_check
    _
  $region35: #{mccformers_s1_forward.7} parent=0 // pred_check_branch
    %417 = sbr.rel (0) target = $region37
  $region36: #{mccformers_s1_forward.7} parent=0 // pred_region
    _
  $region37: #{mccformers_s1_forward.7} parent=0 // pred_fallthru
    _

// kernel: mccformers_s1_forward.6
$region0: #{mccformers_s1_forward.6}
  #allocation0 [shape = 'u32[]', space=smem, size = 0x4, offset = 0x4, fixed_abs, tag = 'smem constant byte address 0x4 - core index']
  #allocation1 [shape = 'u32[72,128]{1,0:T(1,128)}', space=vmem, size = 0x9000, scoped, tag = 'internal scratch']
  #allocation2 [shape = 'f32[32,32]{1,0:T(8,128)}', space=vmem, size = 0x4000, scoped, tag = 'scratch operand']
  %s0 = inlined_call_operand.vmem [shape: f32[2,32,32], index: 0, kind: input, shape index: {}]
  %s1 = inlined_call_operand.vmem [shape: bf16[4,32,8], index: 1, kind: input, shape index: {}]
  %s2 = inlined_call_operand.vmem [shape: bf16[4,32,8], index: 2, kind: input, shape index: {}]
  %s3 = inlined_call_operand.vmem [shape: bf16[4,32,8], index: 3, kind: input, shape index: {}]
  %s4 = inlined_call_operand.vmem [shape: bf16[4,8,32], index: 4, kind: input, shape index: {}]
  %s5 = inlined_call_operand.vmem [shape: f32[4,1,8], index: 5, kind: input, shape index: {}]
  %s6 = inlined_call_operand.vmem [shape: f32[4,1,8], index: 6, kind: input, shape index: {}]
  %s7 = inlined_call_operand.vmem [shape: f32[4,1,8], index: 7, kind: input, shape index: {}]
  %s8 = inlined_call_operand.vmem [shape: f32[1,32], index: 8, kind: input, shape index: {}]
  %s9 = inlined_call_operand.vmem [shape: f32[1,32], index: 9, kind: input, shape index: {}]
  %s10 = inlined_call_operand.vmem [shape: f32[1,32], index: 10, kind: input, shape index: {}]
  %s11 = inlined_call_operand.vmem [shape: f32[2,32,32], index: 11, kind: output, shape index: {}]
  %s12 = sld [smem:[#allocation0]]
  $region84: #{mccformers_s1_forward.6} parent=0
    _
  %s14 = ssub.s32 1, %s12
  %s15 = scalar_select 0, %s14, %s12
  loop: start=0, step=1, limit=4
  $region2: #{mccformers_s1_forward.6} parent=0 // loop_pre_header
    _
  $region3: #{mccformers_s1_forward.6} parent=0 // loop_header
    %s17 = sphi 0, %s21
    %p18 = scmp.ge.s32.totalorder %s17, 4
    %s27 = sphi 0, %s29
    %s30 = sphi 0, %s27
    %s31 = sphi 0, %s30
    %s47 = sphi 0, %s31
    %s51 = sphi 0, %s51
    %s53 = sphi 0, %s51
    %s54 = sphi 0, %s53
    %s68 = sphi 0, %s54
    %s72 = sphi 0, %s72
    %s74 = sphi 0, %s72
    %s75 = sphi 0, %s74
    %s89 = sphi 0, %s75
    %s93 = sphi 0, %s93
    %s95 = sphi 0, %s93
    %s96 = sphi 0, %s95
    %s110 = sphi 0, %s96
    %s114 = sphi 0, %s114
    %s116 = sphi 0, %s114
    %s117 = sphi 0, %s116
    %s131 = sphi 0, %s117
    %s135 = sphi 0, %s135
    %s137 = sphi 0, %s135
    %s138 = sphi 0, %s137
    %s152 = sphi 0, %s138
    %s156 = sphi 0, %s156
    %s158 = sphi 0, %s156
    %s159 = sphi 0, %s158
    %s173 = sphi 0, %s159
    %s177 = sphi 0, %s177
    %s179 = sphi 0, %s177
    %s180 = sphi 0, %s179
    %s194 = sphi 0, %s180
    %s198 = sphi 0, %s198
    %s200 = sphi 0, %s198
    %s201 = sphi 0, %s200
    %s215 = sphi 0, %s201
    %s219 = sphi 0, %s219
    %s221 = sphi 0, %s219
    %s222 = sphi 0, %s221
    %s236 = sphi 0, %s222
    %s240 = sphi 0, %s240
    %s242 = sphi 0, %s240
    %s243 = sphi 0, %s242
    %s257 = sphi 0, %s243
    %s263 = sphi 0, %s265
    %s266 = sphi 0, %s263
    %s267 = sphi 0, %s266
    %s283 = sphi 0, %s267
  $region4: #{mccformers_s1_forward.6} parent=0 // loop_header_branch
    %20 = sbr.rel (%p18) target = $region8
  $region5: #{mccformers_s1_forward.6} parent=0 // loop_body
    %s22 = ssub.s32 %s17, 1
    %s23 = ssub.s32 %s17, 2
    %s24 = sadd.s32 %s17, 1
    %s25 = ssub.s32 %s17, %s24
    %p26 = scmp.eq.s32.totalorder %s25, 0
    %s28 = sadd.s32 %s27, 1
    %s29 = scalar_select %p26, %s27, %s28
    %p32 = pneg %p26
    %p33 = scmp.eq.s32.totalorder %s17, 1
    %p34 = por %p32, %p33
    %p35 = scmp.ne.s32.totalorder %s27, %s30
    %p36 = scmp.eq.s32.totalorder %s17, 0
    %p37 = por %p35, %p36
    %p38 = scmp.ne.s32.totalorder %s27, %s30
    %p39 = scmp.eq.s32.totalorder %s22, 1
    %p40 = por %p38, %p39
    %p41 = scmp.ne.s32.totalorder %s30, %s31
    %p42 = scmp.eq.s32.totalorder %s22, 0
    %p43 = por %p41, %p42
    %p44 = scmp.ne.s32.totalorder %s30, %s31
    %p45 = scmp.eq.s32.totalorder %s23, 1
    %p46 = por %p44, %p45
    %p48 = scmp.ne.s32.totalorder %s31, %s47
    %p49 = scmp.eq.s32.totalorder %s23, 0
    %p50 = por %p48, %p49
    %s52 = sadd.s32 %s51, 1
    %p55 = scmp.eq.s32.totalorder %s17, 1
    %p56 = scmp.ne.s32.totalorder %s51, %s53
    %p57 = scmp.eq.s32.totalorder %s17, 0
    %p58 = por %p56, %p57
    %p59 = scmp.ne.s32.totalorder %s51, %s53
    %p60 = scmp.eq.s32.totalorder %s22, 1
    %p61 = por %p59, %p60
    %p62 = scmp.ne.s32.totalorder %s53, %s54
    %p63 = scmp.eq.s32.totalorder %s22, 0
    %p64 = por %p62, %p63
    %p65 = scmp.ne.s32.totalorder %s53, %s54
    %p66 = scmp.eq.s32.totalorder %s23, 1
    %p67 = por %p65, %p66
    %p69 = scmp.ne.s32.totalorder %s54, %s68
    %p70 = scmp.eq.s32.totalorder %s23, 0
    %p71 = por %p69, %p70
    %s73 = sadd.s32 %s72, 1
    %p76 = scmp.eq.s32.totalorder %s17, 1
    %p77 = scmp.ne.s32.totalorder %s72, %s74
    %p78 = scmp.eq.s32.totalorder %s17, 0
    %p79 = por %p77, %p78
    %p80 = scmp.ne.s32.totalorder %s72, %s74
    %p81 = scmp.eq.s32.totalorder %s22, 1
    %p82 = por %p80, %p81
    %p83 = scmp.ne.s32.totalorder %s74, %s75
    %p84 = scmp.eq.s32.totalorder %s22, 0
    %p85 = por %p83, %p84
    %p86 = scmp.ne.s32.totalorder %s74, %s75
    %p87 = scmp.eq.s32.totalorder %s23, 1
    %p88 = por %p86, %p87
    %p90 = scmp.ne.s32.totalorder %s75, %s89
    %p91 = scmp.eq.s32.totalorder %s23, 0
    %p92 = por %p90, %p91
    %s94 = sadd.s32 %s93, 1
    %p97 = scmp.eq.s32.totalorder %s17, 1
    %p98 = scmp.ne.s32.totalorder %s93, %s95
    %p99 = scmp.eq.s32.totalorder %s17, 0
    %p100 = por %p98, %p99
    %p101 = scmp.ne.s32.totalorder %s93, %s95
    %p102 = scmp.eq.s32.totalorder %s22, 1
    %p103 = por %p101, %p102
    %p104 = scmp.ne.s32.totalorder %s95, %s96
    %p105 = scmp.eq.s32.totalorder %s22, 0
    %p106 = por %p104, %p105
    %p107 = scmp.ne.s32.totalorder %s95, %s96
    %p108 = scmp.eq.s32.totalorder %s23, 1
    %p109 = por %p107, %p108
    %p111 = scmp.ne.s32.totalorder %s96, %s110
    %p112 = scmp.eq.s32.totalorder %s23, 0
    %p113 = por %p111, %p112
    %s115 = sadd.s32 %s114, 1
    %p118 = scmp.eq.s32.totalorder %s17, 1
    %p119 = scmp.ne.s32.totalorder %s114, %s116
    %p120 = scmp.eq.s32.totalorder %s17, 0
    %p121 = por %p119, %p120
    %p122 = scmp.ne.s32.totalorder %s114, %s116
    %p123 = scmp.eq.s32.totalorder %s22, 1
    %p124 = por %p122, %p123
    %p125 = scmp.ne.s32.totalorder %s116, %s117
    %p126 = scmp.eq.s32.totalorder %s22, 0
    %p127 = por %p125, %p126
    %p128 = scmp.ne.s32.totalorder %s116, %s117
    %p129 = scmp.eq.s32.totalorder %s23, 1
    %p130 = por %p128, %p129
    %p132 = scmp.ne.s32.totalorder %s117, %s131
    %p133 = scmp.eq.s32.totalorder %s23, 0
    %p134 = por %p132, %p133
    %s136 = sadd.s32 %s135, 1
    %p139 = scmp.eq.s32.totalorder %s17, 1
    %p140 = scmp.ne.s32.totalorder %s135, %s137
    %p141 = scmp.eq.s32.totalorder %s17, 0
    %p142 = por %p140, %p141
    %p143 = scmp.ne.s32.totalorder %s135, %s137
    %p144 = scmp.eq.s32.totalorder %s22, 1
    %p145 = por %p143, %p144
    %p146 = scmp.ne.s32.totalorder %s137, %s138
    %p147 = scmp.eq.s32.totalorder %s22, 0
    %p148 = por %p146, %p147
    %p149 = scmp.ne.s32.totalorder %s137, %s138
    %p150 = scmp.eq.s32.totalorder %s23, 1
    %p151 = por %p149, %p150
    %p153 = scmp.ne.s32.totalorder %s138, %s152
    %p154 = scmp.eq.s32.totalorder %s23, 0
    %p155 = por %p153, %p154
    %s157 = sadd.s32 %s156, 1
    %p160 = scmp.eq.s32.totalorder %s17, 1
    %p161 = scmp.ne.s32.totalorder %s156, %s158
    %p162 = scmp.eq.s32.totalorder %s17, 0
    %p163 = por %p161, %p162
    %p164 = scmp.ne.s32.totalorder %s156, %s158
    %p165 = scmp.eq.s32.totalorder %s22, 1
    %p166 = por %p164, %p165
    %p167 = scmp.ne.s32.totalorder %s158, %s159
    %p168 = scmp.eq.s32.totalorder %s22, 0
    %p169 = por %p167, %p168
    %p170 = scmp.ne.s32.totalorder %s158, %s159
    %p171 = scmp.eq.s32.totalorder %s23, 1
    %p172 = por %p170, %p171
    %p174 = scmp.ne.s32.totalorder %s159, %s173
    %p175 = scmp.eq.s32.totalorder %s23, 0
    %p176 = por %p174, %p175
    %s178 = sadd.s32 %s177, 1
    %p181 = scmp.eq.s32.totalorder %s17, 1
    %p182 = scmp.ne.s32.totalorder %s177, %s179
    %p183 = scmp.eq.s32.totalorder %s17, 0
    %p184 = por %p182, %p183
    %p185 = scmp.ne.s32.totalorder %s177, %s179
    %p186 = scmp.eq.s32.totalorder %s22, 1
    %p187 = por %p185, %p186
    %p188 = scmp.ne.s32.totalorder %s179, %s180
    %p189 = scmp.eq.s32.totalorder %s22, 0
    %p190 = por %p188, %p189
    %p191 = scmp.ne.s32.totalorder %s179, %s180
    %p192 = scmp.eq.s32.totalorder %s23, 1
    %p193 = por %p191, %p192
    %p195 = scmp.ne.s32.totalorder %s180, %s194
    %p196 = scmp.eq.s32.totalorder %s23, 0
    %p197 = por %p195, %p196
    %s199 = sadd.s32 %s198, 1
    %p202 = scmp.eq.s32.totalorder %s17, 1
    %p203 = scmp.ne.s32.totalorder %s198, %s200
    %p204 = scmp.eq.s32.totalorder %s17, 0
    %p205 = por %p203, %p204
    %p206 = scmp.ne.s32.totalorder %s198, %s200
    %p207 = scmp.eq.s32.totalorder %s22, 1
    %p208 = por %p206, %p207
    %p209 = scmp.ne.s32.totalorder %s200, %s201
    %p210 = scmp.eq.s32.totalorder %s22, 0
    %p211 = por %p209, %p210
    %p212 = scmp.ne.s32.totalorder %s200, %s201
    %p213 = scmp.eq.s32.totalorder %s23, 1
    %p214 = por %p212, %p213
    %p216 = scmp.ne.s32.totalorder %s201, %s215
    %p217 = scmp.eq.s32.totalorder %s23, 0
    %p218 = por %p216, %p217
    %s220 = sadd.s32 %s219, 1
    %p223 = scmp.eq.s32.totalorder %s17, 1
    %p224 = scmp.ne.s32.totalorder %s219, %s221
    %p225 = scmp.eq.s32.totalorder %s17, 0
    %p226 = por %p224, %p225
    %p227 = scmp.ne.s32.totalorder %s219, %s221
    %p228 = scmp.eq.s32.totalorder %s22, 1
    %p229 = por %p227, %p228
    %p230 = scmp.ne.s32.totalorder %s221, %s222
    %p231 = scmp.eq.s32.totalorder %s22, 0
    %p232 = por %p230, %p231
    %p233 = scmp.ne.s32.totalorder %s221, %s222
    %p234 = scmp.eq.s32.totalorder %s23, 1
    %p235 = por %p233, %p234
    %p237 = scmp.ne.s32.totalorder %s222, %s236
    %p238 = scmp.eq.s32.totalorder %s23, 0
    %p239 = por %p237, %p238
    %s241 = sadd.s32 %s240, 1
    %p244 = scmp.eq.s32.totalorder %s17, 1
    %p245 = scmp.ne.s32.totalorder %s240, %s242
    %p246 = scmp.eq.s32.totalorder %s17, 0
    %p247 = por %p245, %p246
    %p248 = scmp.ne.s32.totalorder %s240, %s242
    %p249 = scmp.eq.s32.totalorder %s22, 1
    %p250 = por %p248, %p249
    %p251 = scmp.ne.s32.totalorder %s242, %s243
    %p252 = scmp.eq.s32.totalorder %s22, 0
    %p253 = por %p251, %p252
    %p254 = scmp.ne.s32.totalorder %s242, %s243
    %p255 = scmp.eq.s32.totalorder %s23, 1
    %p256 = por %p254, %p255
    %p258 = scmp.ne.s32.totalorder %s243, %s257
    %p259 = scmp.eq.s32.totalorder %s23, 0
    %p260 = por %p258, %p259
    %s261 = ssub.s32 %s17, %s24
    %p262 = scmp.eq.s32.totalorder %s261, 0
    %s264 = sadd.s32 %s263, 1
    %s265 = scalar_select %p262, %s263, %s264
    %p268 = pneg %p262
    %p269 = scmp.eq.s32.totalorder %s17, 1
    %p270 = por %p268, %p269
    %p271 = scmp.ne.s32.totalorder %s263, %s266
    %p272 = scmp.eq.s32.totalorder %s17, 0
    %p273 = por %p271, %p272
    %p274 = scmp.ne.s32.totalorder %s263, %s266
    %p275 = scmp.eq.s32.totalorder %s22, 1
    %p276 = por %p274, %p275
    %p277 = scmp.ne.s32.totalorder %s266, %s267
    %p278 = scmp.eq.s32.totalorder %s22, 0
    %p279 = por %p277, %p278
    %p280 = scmp.ne.s32.totalorder %s266, %s267
    %p281 = scmp.eq.s32.totalorder %s23, 1
    %p282 = por %p280, %p281
    %p284 = scmp.ne.s32.totalorder %s267, %s283
    %p285 = scmp.eq.s32.totalorder %s23, 0
    %p286 = por %p284, %p285
    %p287 = scmp.le.s32.totalorder 1, %s17
    %p288 = scmp.lt.s32.totalorder %s17, 3
    %p289 = pnand %p287, %p288
    %p290 = pneg %p289
    // Predicated region
    $region9: #{mccformers_s1_forward.6} parent=5 // pred_check
      _
    $region10: #{mccformers_s1_forward.6} parent=5 // pred_check_branch
      %292 = sbr.rel (%p289) target = $region12
    $region11: #{mccformers_s1_forward.6} parent=5 // pred_region
      %s293 = ssub.s32 %s17, 1
      // Predicated region
      $region13: #{mccformers_s1_forward.6} parent=11 // pred_check
        %p294 = pneg %p64
      $region14: #{mccformers_s1_forward.6} parent=11 // pred_check_branch
        %296 = sbr.rel (%p294) target = $region16
      $region15: #{mccformers_s1_forward.6} parent=11 // pred_region
        _
      $region16: #{mccformers_s1_forward.6} parent=11 // pred_fallthru
        _
      // Predicated region
      $region17: #{mccformers_s1_forward.6} parent=11 // pred_check
        %p297 = pneg %p85
      $region18: #{mccformers_s1_forward.6} parent=11 // pred_check_branch
        %299 = sbr.rel (%p297) target = $region20
      $region19: #{mccformers_s1_forward.6} parent=11 // pred_region
        _
      $region20: #{mccformers_s1_forward.6} parent=11 // pred_fallthru
        _
      // Predicated region
      $region21: #{mccformers_s1_forward.6} parent=11 // pred_check
        %p300 = pneg %p106
      $region22: #{mccformers_s1_forward.6} parent=11 // pred_check_branch
        %302 = sbr.rel (%p300) target = $region24
      $region23: #{mccformers_s1_forward.6} parent=11 // pred_region
        _
      $region24: #{mccformers_s1_forward.6} parent=11 // pred_fallthru
        _
      // Predicated region
      $region25: #{mccformers_s1_forward.6} parent=11 // pred_check
        %p303 = pneg %p127
      $region26: #{mccformers_s1_forward.6} parent=11 // pred_check_branch
        %305 = sbr.rel (%p303) target = $region28
      $region27: #{mccformers_s1_forward.6} parent=11 // pred_region
        _
      $region28: #{mccformers_s1_forward.6} parent=11 // pred_fallthru
        _
      // Predicated region
      $region29: #{mccformers_s1_forward.6} parent=11 // pred_check
        %p306 = pneg %p148
      $region30: #{mccformers_s1_forward.6} parent=11 // pred_check_branch
        %308 = sbr.rel (%p306) target = $region32
      $region31: #{mccformers_s1_forward.6} parent=11 // pred_region
        _
      $region32: #{mccformers_s1_forward.6} parent=11 // pred_fallthru
        _
      // Predicated region
      $region33: #{mccformers_s1_forward.6} parent=11 // pred_check
        %p309 = pneg %p169
      $region34: #{mccformers_s1_forward.6} parent=11 // pred_check_branch
        %311 = sbr.rel (%p309) target = $region36
      $region35: #{mccformers_s1_forward.6} parent=11 // pred_region
        _
      $region36: #{mccformers_s1_forward.6} parent=11 // pred_fallthru
        _
      // Predicated region
      $region37: #{mccformers_s1_forward.6} parent=11 // pred_check
        %p312 = pneg %p190
      $region38: #{mccformers_s1_forward.6} parent=11 // pred_check_branch
        %314 = sbr.rel (%p312) target = $region40
      $region39: #{mccformers_s1_forward.6} parent=11 // pred_region
        _
      $region40: #{mccformers_s1_forward.6} parent=11 // pred_fallthru
        _
      // Predicated region
      $region41: #{mccformers_s1_forward.6} parent=11 // pred_check
        %p315 = pneg %p211
      $region42: #{mccformers_s1_forward.6} parent=11 // pred_check_branch
        %317 = sbr.rel (%p315) target = $region44
      $region43: #{mccformers_s1_forward.6} parent=11 // pred_region
        _
      $region44: #{mccformers_s1_forward.6} parent=11 // pred_fallthru
        _
      // Predicated region
      $region45: #{mccformers_s1_forward.6} parent=11 // pred_check
        %p318 = pneg %p232
      $region46: #{mccformers_s1_forward.6} parent=11 // pred_check_branch
        %320 = sbr.rel (%p318) target = $region48
      $region47: #{mccformers_s1_forward.6} parent=11 // pred_region
        _
      $region48: #{mccformers_s1_forward.6} parent=11 // pred_fallthru
        _
      // Predicated region
      $region49: #{mccformers_s1_forward.6} parent=11 // pred_check
        %p321 = pneg %p253
      $region50: #{mccformers_s1_forward.6} parent=11 // pred_check_branch
        %323 = sbr.rel (%p321) target = $region52
      $region51: #{mccformers_s1_forward.6} parent=11 // pred_region
        _
      $region52: #{mccformers_s1_forward.6} parent=11 // pred_fallthru
        _
    $region12: #{mccformers_s1_forward.6} parent=5 // pred_fallthru
      _
    %p324 = scmp.lt.s32.totalorder %s17, 2
    // Predicated region
    $region53: #{mccformers_s1_forward.6} parent=5 // pred_check
      %p325 = pneg %p324
    $region54: #{mccformers_s1_forward.6} parent=5 // pred_check_branch
      %327 = sbr.rel (%p325) target = $region56
    $region55: #{mccformers_s1_forward.6} parent=5 // pred_region
      // Predicated region
      $region57: #{mccformers_s1_forward.6} parent=55 // pred_check
        %p328 = pneg %p37
      $region58: #{mccformers_s1_forward.6} parent=55 // pred_check_branch
        %330 = sbr.rel (%p328) target = $region60
      $region59: #{mccformers_s1_forward.6} parent=55 // pred_region
        %p331 = scmp.lt.s32.totalorder %s17, 1
        %s332 = scalar_select %p331, %s17, 1
        %s333 = smul.addr %s332, 4
        %s334 = smul.addr %s333, 8
        %s335 = scalar_lea.vmem %s0, %s334
      $region60: #{mccformers_s1_forward.6} parent=55 // pred_fallthru
        _
    $region56: #{mccformers_s1_forward.6} parent=5 // pred_fallthru
      _
    %p336 = scmp.le.s32.totalorder 1, %s17
    %p337 = scmp.lt.s32.totalorder %s17, 3
    %p338 = pnand %p336, %p337
    %p339 = pneg %p338
    // Predicated region
    $region61: #{mccformers_s1_forward.6} parent=5 // pred_check
      _
    $region62: #{mccformers_s1_forward.6} parent=5 // pred_check_branch
      %341 = sbr.rel (%p338) target = $region64
    $region63: #{mccformers_s1_forward.6} parent=5 // pred_region
      %s342 = ssub.s32 %s17, 1
      %p343 = scmp.lt.s32.totalorder %s22, 1
      %s344 = scalar_select %p343, %s22, 1
      %s345 = smul.addr %s344, 4
      %s346 = smul.addr %s345, 8
      %s347 = scalar_lea.vmem %s0, %s346
      %p348 = pneg %p43
      %p349 = pneg %p40
      %p350 = pneg %p64
      %p351 = pneg %p61
      %p352 = pneg %p85
      %p353 = pneg %p82
      %p354 = pneg %p106
      %p355 = pneg %p103
      %p356 = pneg %p127
      %p357 = pneg %p124
      %p358 = pneg %p148
      %p359 = pneg %p145
      %p360 = pneg %p169
      %p361 = pneg %p166
      %p362 = pneg %p190
      %p363 = pneg %p187
      %p364 = pneg %p211
      %p365 = pneg %p208
      %p366 = pneg %p232
      %p367 = pneg %p229
      %p368 = pneg %p253
      %p369 = pneg %p250
      %p370 = pneg %p279
      %p371 = pneg %p276
      %p372 = scmp.lt.s32.totalorder %s22, 1
      %s373 = scalar_select %p372, %s22, 1
      %s374 = smul.addr %s373, 4
      %s375 = smul.addr %s374, 8
      %s376 = scalar_lea.vmem %s11, %s375
      %p377 = scmp.lt.s32.totalorder %s22, 1
      %s378 = scalar_select %p377, %s22, 1
      %s379 = smul.addr %s378, 4
      %s380 = smul.addr %s379, 8
      %s381 = scalar_lea.vmem %s0, %s380
      %p382 = scmp.lt.s32.totalorder %s22, 1
      %s383 = scalar_select %p382, %s22, 1
      %s384 = smul.addr %s383, 4
      %s385 = smul.addr %s384, 8
      %s386 = scalar_lea.vmem %s11, %s385
      %v388 = vld [vmem:[%s381] sm:$0xff]
      %v389 = vld [vmem:[%s381 + $0x8] sm:$0xff]
      %v390 = vld [vmem:[%s381 + $0x10] sm:$0xff]
      %v391 = vld [vmem:[%s381 + $0x18] sm:$0xff]
      %v392 = vpack.c.bf16 %v389, %v388
      %v393 = vpack.c.bf16 %v391, %v390
      %vm394 = vcmask 261120
      %395 = vst.msk [vmem:[#allocation2] sm:$0xff] %vm394, 0.0
      %396 = vst.msk [vmem:[#allocation2 + $0x8] sm:$0xff] %vm394, 0.0
      %397 = vst.msk [vmem:[#allocation2 + $0x10] sm:$0xff] %vm394, 0.0
      %398 = vst.msk [vmem:[#allocation2 + $0x18] sm:$0xff] %vm394, 0.0
      loop: start=0, step=1, limit=4
      $region65: #{mccformers_s1_forward.6} parent=63 // loop_pre_header
        _
      $region66: #{mccformers_s1_forward.6} parent=63 // loop_header
        %s400 = sphi 0, %s404
        %p401 = scmp.ge.s32.totalorder %s400, 4
      $region67: #{mccformers_s1_forward.6} parent=63 // loop_header_branch
        %403 = sbr.rel (%p401) target = $region71
      $region68: #{mccformers_s1_forward.6} parent=63 // loop_body
        %s405 = smul.u32 %s400, 4
        %s406 = smul.addr %s405, 4
        %s407 = scalar_lea.vmem %s1, %s406
        %v408 = vld [vmem:[%s407] sm:$0xf]
        %v409 = vld [vmem:[%s407 + $0x4] sm:$0xf]
        %v410 = vld [vmem:[%s407 + $0x8] sm:$0xf]
        %v411 = vld [vmem:[%s407 + $0xc] sm:$0xf]
        %s412 = smul.addr %s405, 4
        %s413 = scalar_lea.vmem %s2, %s412
        %v414 = vld [vmem:[%s413] sm:$0xf]
        %v415 = vld [vmem:[%s413 + $0x4] sm:$0xf]
        %v416 = vld [vmem:[%s413 + $0x8] sm:$0xf]
        %v417 = vld [vmem:[%s413 + $0xc] sm:$0xf]
        %s418 = smul.addr %s405, 4
        %s419 = scalar_lea.vmem %s3, %s418
        %v420 = vld [vmem:[%s419] sm:$0xf]
        %v421 = vld [vmem:[%s419 + $0x4] sm:$0xf]
        %v422 = vld [vmem:[%s419 + $0x8] sm:$0xf]
        %v423 = vld [vmem:[%s419 + $0xc] sm:$0xf]
        %s424 = scalar_lea.vmem %s5, %s400
        %v425 = vld [vmem:[%s424] sm:$0x1]
        %v427 = vperm.slane %v425, 0
        %v433 = vunpack.c.l.b16 %v408
        %v434 = vunpack.c.l.b16 %v409
        %v435 = vunpack.c.l.b16 %v410
        %v436 = vunpack.c.l.b16 %v411
        %v437 = vpack.c.b16 %v434, %v433
        %v438 = vpack.c.b16 %v436, %v435
        %v442 = vsel %vm394, %v392, 0
        %v445 = vsel %vm394, %v393, 0
        %447 = vmatpush.bf16.msra.mxu0 0
        %448 = vmatpush.bf16.msra.mxu0 0
        %449 = vmatpush.bf16.msra.mxu0 0
        %450 = vmatpush.bf16.msra.mxu0 0
        %451 = vmatpush.bf16.msra.mxu0 0
        %452 = vmatpush.bf16.msra.mxu0 0
        %453 = vmatpush.bf16.msra.mxu0 %v438
        %454 = vmatpush.bf16.msra.mxu0 %v437
        %455 = vmatmul.bf16.gmra.mxu0 %v442
        %v456 = vpop.f32.mrf.mxu0
        %v457 = vadd.f32 %v427, %v456
        %v458 = vpop.f32.mrf.mxu0
        %v459 = vadd.f32 %v427, %v458
        %460 = vmatmul.bf16.gmra.mxu0 %v445
        %v461 = vpop.f32.mrf.mxu0
        %v462 = vadd.f32 %v427, %v461
        %v463 = vpop.f32.mrf.mxu0
        %v464 = vadd.f32 %v427, %v463
        %465 = vdwg.mxu0
        %v466 = vmul.f32 %v457, 0.35355338
        %v467 = vmul.f32 %v459, 0.35355338
        %v468 = vmul.f32 %v462, 0.35355338
        %v469 = vmul.f32 %v464, 0.35355338
        %v470 = vpack.c.bf16 %v467, %v466
        %v471 = vpack.c.bf16 %v469, %v468
        %s472 = scalar_lea.vmem %s6, %s400
        %v473 = vld [vmem:[%s472] sm:$0x1]
        %v475 = vperm.slane %v473, 0
        %v481 = vunpack.c.l.b16 %v414
        %v482 = vunpack.c.l.b16 %v415
        %v483 = vunpack.c.l.b16 %v416
        %v484 = vunpack.c.l.b16 %v417
        %v485 = vpack.c.b16 %v482, %v481
        %v486 = vpack.c.b16 %v484, %v483
        %489 = vmatpush.bf16.msra.mxu0 0
        %490 = vmatpush.bf16.msra.mxu0 0
        %491 = vmatpush.bf16.msra.mxu0 0
        %492 = vmatpush.bf16.msra.mxu0 0
        %493 = vmatpush.bf16.msra.mxu0 0
        %494 = vmatpush.bf16.msra.mxu0 0
        %495 = vmatpush.bf16.msra.mxu0 %v486
        %496 = vmatpush.bf16.msra.mxu0 %v485
        %497 = vmatmul.bf16.gmra.mxu0 %v442
        %v498 = vpop.f32.mrf.mxu0
        %v499 = vadd.f32 %v475, %v498
        %v500 = vpop.f32.mrf.mxu0
        %v501 = vadd.f32 %v475, %v500
        %502 = vmatmul.bf16.gmra.mxu0 %v445
        %v503 = vpop.f32.mrf.mxu0
        %v504 = vadd.f32 %v475, %v503
        %v505 = vpop.f32.mrf.mxu0
        %v506 = vadd.f32 %v475, %v505
        %507 = vdwg.mxu0
        %v508 = vpack.c.bf16 %v501, %v499
        %v509 = vpack.c.bf16 %v506, %v504
        %s510 = scalar_lea.vmem %s7, %s400
        %v511 = vld [vmem:[%s510] sm:$0x1]
        %v513 = vperm.slane %v511, 0
        %v519 = vunpack.c.l.b16 %v420
        %v520 = vunpack.c.l.b16 %v421
        %v521 = vunpack.c.l.b16 %v422
        %v522 = vunpack.c.l.b16 %v423
        %v523 = vpack.c.b16 %v520, %v519
        %v524 = vpack.c.b16 %v522, %v521
        %527 = vmatpush.bf16.msra.mxu0 0
        %528 = vmatpush.bf16.msra.mxu0 0
        %529 = vmatpush.bf16.msra.mxu0 0
        %530 = vmatpush.bf16.msra.mxu0 0
        %531 = vmatpush.bf16.msra.mxu0 0
        %532 = vmatpush.bf16.msra.mxu0 0
        %533 = vmatpush.bf16.msra.mxu0 %v524
        %534 = vmatpush.bf16.msra.mxu0 %v523
        %535 = vmatmul.bf16.gmra.mxu0 %v442
        %v536 = vpop.f32.mrf.mxu0
        %v537 = vadd.f32 %v513, %v536
        %v538 = vpop.f32.mrf.mxu0
        %v539 = vadd.f32 %v513, %v538
        %540 = vmatmul.bf16.gmra.mxu0 %v445
        %v541 = vpop.f32.mrf.mxu0
        %v542 = vadd.f32 %v513, %v541
        %v543 = vpop.f32.mrf.mxu0
        %v544 = vadd.f32 %v513, %v543
        %545 = vdwg.mxu0
        %v546 = vpack.c.bf16 %v539, %v537
        %v547 = vpack.c.bf16 %v544, %v542
        %vm548 = vcmask 64512
        %v550 = vsel %vm548, %v470, 0
        %v553 = vsel %vm548, %v471, 0
        %v556 = vsel %vm548, %v508, 0
        %v559 = vsel %vm548, %v509, 0
        %561 = vmatpush.bf16.xpose.msra.mxu0 0
        %562 = vmatpush.bf16.xpose.msra.mxu0 0
        %563 = vmatpush.bf16.xpose.msra.mxu0 0
        %564 = vmatpush.bf16.xpose.msra.mxu0 0
        %565 = vmatpush.bf16.xpose.msra.mxu0 0
        %566 = vmatpush.bf16.xpose.msra.mxu0 0
        %567 = vmatpush.bf16.xpose.msra.mxu0 %v559
        %568 = vmatpush.bf16.xpose.msra.mxu0 %v556
        %569 = vmatmul.bf16.gmra.mxu0 %v550
        %v570 = vpop.f32.mrf.mxu0
        %v571 = vadd.f32 0.0, %v570
        %v572 = vpop.f32.mrf.mxu0
        %v573 = vadd.f32 0.0, %v572
        %574 = vmatmul.bf16.gmra.mxu0 %v553
        %v575 = vpop.f32.mrf.mxu0
        %v576 = vadd.f32 0.0, %v575
        %v577 = vpop.f32.mrf.mxu0
        %v578 = vadd.f32 0.0, %v577
        %579 = vdwg.mxu0
        %v580 = vsel %vm394, %v571, -inf
        %581 = vmax.xlane.f32.xlu0 %v580
        %v582 = vpop.xlane.xlu0 %581
        %v583 = vsel %vm394, %v573, -inf
        %584 = vmax.xlane.f32.xlu0 %v583
        %v585 = vpop.xlane.xlu0 %584
        %v586 = vsel %vm394, %v576, -inf
        %587 = vmax.xlane.f32.xlu0 %v586
        %v588 = vpop.xlane.xlu0 %587
        %v589 = vsel %vm394, %v578, -inf
        %590 = vmax.xlane.f32.xlu0 %v589
        %v591 = vpop.xlane.xlu0 %590
        %v592 = vsub.f32 %v571, %v582
        %v593 = vsub.f32 %v573, %v585
        %v594 = vsub.f32 %v576, %v588
        %v595 = vsub.f32 %v578, %v591
        %v596 = vpack.c.bf16 %v593, %v592
        %v597 = vpack.c.bf16 %v595, %v594
        %v598 = vunpack.c.l.bf16 %v596
        %v599 = vunpack.c.h.bf16 %v596
        %v600 = vunpack.c.l.bf16 %v597
        %v601 = vunpack.c.h.bf16 %v597
        %v602 = vmul.f32 %v598, 1.442695
        %v603 = vpow.pop %v602
        %v604 = vmul.f32 %v599, 1.442695
        %v605 = vpow.pop %v604
        %v606 = vmul.f32 %v600, 1.442695
        %v607 = vpow.pop %v606
        %v608 = vmul.f32 %v601, 1.442695
        %v609 = vpow.pop %v608
        %v610 = vpack.c.bf16 %v605, %v603
        %v611 = vpack.c.bf16 %v609, %v607
        %v612 = vunpack.c.l.bf16 %v610
        %v613 = vunpack.c.h.bf16 %v610
        %v614 = vunpack.c.l.bf16 %v611
        %v615 = vunpack.c.h.bf16 %v611
        %v616 = vsel %vm394, %v612, 0.0
        %617 = vadd.xlane.f32.xlu0 %v616
        %v618 = vpop.xlane.xlu0 %617
        %v619 = vsel %vm394, %v613, 0.0
        %620 = vadd.xlane.f32.xlu0 %v619
        %v621 = vpop.xlane.xlu0 %620
        %v622 = vsel %vm394, %v614, 0.0
        %623 = vadd.xlane.f32.xlu0 %v622
        %v624 = vpop.xlane.xlu0 %623
        %v625 = vsel %vm394, %v615, 0.0
        %626 = vadd.xlane.f32.xlu0 %v625
        %v627 = vpop.xlane.xlu0 %626
        %v628 = vrcp.pop %v618
        %v629 = vrcp.pop %v621
        %v630 = vrcp.pop %v624
        %v631 = vrcp.pop %v627
        %v633 = vsel %vm394, %v610, 0
        %v636 = vsel %vm394, %v611, 0
        %638 = vmatpush.bf16.msra.mxu0 0
        %639 = vmatpush.bf16.msra.mxu0 0
        %640 = vmatpush.bf16.msra.mxu0 0
        %641 = vmatpush.bf16.msra.mxu0 0
        %642 = vmatpush.bf16.msra.mxu0 0
        %643 = vmatpush.bf16.msra.mxu0 0
        %644 = vmatpush.bf16.msra.mxu0 %v547
        %645 = vmatpush.bf16.msra.mxu0 %v546
        %646 = vmatmul.bf16.gmra.mxu0 %v633
        %v647 = vpop.f32.mrf.mxu0
        %v648 = vadd.f32 0.0, %v647
        %v649 = vpop.f32.mrf.mxu0
        %v650 = vadd.f32 0.0, %v649
        %651 = vmatmul.bf16.gmra.mxu0 %v636
        %v652 = vpop.f32.mrf.mxu0
        %v653 = vadd.f32 0.0, %v652
        %v654 = vpop.f32.mrf.mxu0
        %v655 = vadd.f32 0.0, %v654
        %656 = vdwg.mxu0
        %v657 = vmul.f32 %v648, %v628
        %v658 = vmul.f32 %v650, %v629
        %v659 = vmul.f32 %v653, %v630
        %v660 = vmul.f32 %v655, %v631
        %v661 = vpack.c.bf16 %v658, %v657
        %v662 = vpack.c.bf16 %v660, %v659
        %v663 = vld [vmem:[#allocation2] sm:$0xff]
        %v664 = vld [vmem:[#allocation2 + $0x8] sm:$0xff]
        %v665 = vld [vmem:[#allocation2 + $0x10] sm:$0xff]
        %v666 = vld [vmem:[#allocation2 + $0x18] sm:$0xff]
        %s667 = smul.addr %s400, 4
        %s668 = scalar_lea.vmem %s4, %s667
        %v669 = vld [vmem:[%s668] sm:$0xf]
        %v671 = vsel %vm548, %v661, 0
        %v674 = vsel %vm548, %v662, 0
        %vm676 = vcmask 1043456
        %v678 = vsel %vm676, %v669, 0
        %680 = vmatpush.bf16.msra.mxu0 0
        %681 = vmatpush.bf16.msra.mxu0 0
        %682 = vmatpush.bf16.msra.mxu0 0
        %683 = vmatpush.bf16.msra.mxu0 0
        %684 = vmatpush.bf16.msra.mxu0 0
        %685 = vmatpush.bf16.msra.mxu0 0
        %686 = vmatpush.bf16.msra.mxu0 0
        %687 = vmatpush.bf16.msra.mxu0 %v678
        %688 = vmatmul.bf16.gmra.mxu0 %v671
        %v689 = vpop.f32.mrf.mxu0
        %v690 = vadd.f32 0.0, %v689
        %v691 = vpop.f32.mrf.mxu0
        %v692 = vadd.f32 0.0, %v691
        %693 = vmatmul.bf16.gmra.mxu0 %v674
        %v694 = vpop.f32.mrf.mxu0
        %v695 = vadd.f32 0.0, %v694
        %v696 = vpop.f32.mrf.mxu0
        %v697 = vadd.f32 0.0, %v696
        %698 = vdwg.mxu0
        %v699 = vadd.f32 %v663, %v690
        %v700 = vadd.f32 %v664, %v692
        %v701 = vadd.f32 %v665, %v695
        %v702 = vadd.f32 %v666, %v697
        %703 = vst.msk [vmem:[#allocation2] sm:$0xff] %vm394, %v699
        %704 = vst.msk [vmem:[#allocation2 + $0x8] sm:$0xff] %vm394, %v700
        %705 = vst.msk [vmem:[#allocation2 + $0x10] sm:$0xff] %vm394, %v701
        %706 = vst.msk [vmem:[#allocation2 + $0x18] sm:$0xff] %vm394, %v702
      $region69: #{mccformers_s1_forward.6} parent=63 // loop_footer
        %s404 = sadd.s32 1, %s400
      $region70: #{mccformers_s1_forward.6} parent=63 // loop_footer_branch
        %399 = sbr.rel target = $region66
      $region71: #{mccformers_s1_forward.6} parent=63 // loop_exit
        _
      %v707 = vld [vmem:[#allocation2] sm:$0xff]
      %v708 = vld [vmem:[#allocation2 + $0x8] sm:$0xff]
      %v709 = vld [vmem:[#allocation2 + $0x10] sm:$0xff]
      %v710 = vld [vmem:[#allocation2 + $0x18] sm:$0xff]
      %v711 = vadd.f32 %v388, %v707
      %v712 = vadd.f32 %v389, %v708
      %v713 = vadd.f32 %v390, %v709
      %v714 = vadd.f32 %v391, %v710
      %v715 = vld [vmem:[%s8] sm:$0x1]
      %v717 = vperm.slane %v715, 0
      %v719 = vadd.f32 %v711, %v717
      %v720 = vadd.f32 %v712, %v717
      %v721 = vadd.f32 %v713, %v717
      %v722 = vadd.f32 %v714, %v717
      %v723 = vsel %vm394, %v719, 0.0
      %724 = vadd.xlane.f32.xlu0 %v723
      %v725 = vpop.xlane.xlu0 %724
      %v726 = vsel %vm394, %v720, 0.0
      %727 = vadd.xlane.f32.xlu0 %v726
      %v728 = vpop.xlane.xlu0 %727
      %v729 = vsel %vm394, %v721, 0.0
      %730 = vadd.xlane.f32.xlu0 %v729
      %v731 = vpop.xlane.xlu0 %730
      %v732 = vsel %vm394, %v722, 0.0
      %733 = vadd.xlane.f32.xlu0 %v732
      %v734 = vpop.xlane.xlu0 %733
      %v735 = vrcp.pop 32.0
      %v736 = vmul.f32 32.0, %v735
      %v737 = vsub.f32 1.0, %v736
      %v738 = vmul.f32 %v735, %v737
      %v739 = vadd.f32 %v735, %v738
      %vm740 = vweird.f32 %v735
      %v741 = vsel %vm740, %v735, %v739
      %v742 = vmul.f32 %v725, %v741
      %v743 = vmul.f32 %v728, %v741
      %v744 = vmul.f32 %v731, %v741
      %v745 = vmul.f32 %v734, %v741
      %v746 = vsub.f32 %v719, %v742
      %v747 = vsub.f32 %v720, %v743
      %v748 = vsub.f32 %v721, %v744
      %v749 = vsub.f32 %v722, %v745
      %v750 = vmul.f32 %v746, %v746
      %v751 = vmul.f32 %v747, %v747
      %v752 = vmul.f32 %v748, %v748
      %v753 = vmul.f32 %v749, %v749
      %v754 = vsel %vm394, %v750, 0.0
      %755 = vadd.xlane.f32.xlu0 %v754
      %v756 = vpop.xlane.xlu0 %755
      %v757 = vsel %vm394, %v751, 0.0
      %758 = vadd.xlane.f32.xlu0 %v757
      %v759 = vpop.xlane.xlu0 %758
      %v760 = vsel %vm394, %v752, 0.0
      %761 = vadd.xlane.f32.xlu0 %v760
      %v762 = vpop.xlane.xlu0 %761
      %v763 = vsel %vm394, %v753, 0.0
      %764 = vadd.xlane.f32.xlu0 %v763
      %v765 = vpop.xlane.xlu0 %764
      %v766 = vmul.f32 %v756, %v741
      %v767 = vmul.f32 %v759, %v741
      %v768 = vmul.f32 %v762, %v741
      %v769 = vmul.f32 %v765, %v741
      %v770 = vadd.f32 %v766, 1e-05
      %v771 = vadd.f32 %v767, 1e-05
      %v772 = vadd.f32 %v768, 1e-05
      %v773 = vadd.f32 %v769, 1e-05
      %v774 = vrsqrt.pop %v770
      %v775 = vmul.f32 %v774, %v770
      %v776 = vmul.f32 %v775, %v774
      %v777 = vmul.f32 0.5, %v776
      %v778 = vsub.f32 1.5, %v777
      %v779 = vmul.f32 %v774, %v778
      %vm780 = vweird.f32 %v770
      %vm781 = vweird.f32 %v774
      %vm782 = vmor %vm780, %vm781
      %v783 = vsel %vm782, %v774, %v779
      %v784 = vrsqrt.pop %v771
      %v785 = vmul.f32 %v784, %v771
      %v786 = vmul.f32 %v785, %v784
      %v787 = vmul.f32 0.5, %v786
      %v788 = vsub.f32 1.5, %v787
      %v789 = vmul.f32 %v784, %v788
      %vm790 = vweird.f32 %v771
      %vm791 = vweird.f32 %v784
      %vm792 = vmor %vm790, %vm791
      %v793 = vsel %vm792, %v784, %v789
      %v794 = vrsqrt.pop %v772
      %v795 = vmul.f32 %v794, %v772
      %v796 = vmul.f32 %v795, %v794
      %v797 = vmul.f32 0.5, %v796
      %v798 = vsub.f32 1.5, %v797
      %v799 = vmul.f32 %v794, %v798
      %vm800 = vweird.f32 %v772
      %vm801 = vweird.f32 %v794
      %vm802 = vmor %vm800, %vm801
      %v803 = vsel %vm802, %v794, %v799
      %v804 = vrsqrt.pop %v773
      %v805 = vmul.f32 %v804, %v773
      %v806 = vmul.f32 %v805, %v804
      %v807 = vmul.f32 0.5, %v806
      %v808 = vsub.f32 1.5, %v807
      %v809 = vmul.f32 %v804, %v808
      %vm810 = vweird.f32 %v773
      %vm811 = vweird.f32 %v804
      %vm812 = vmor %vm810, %vm811
      %v813 = vsel %vm812, %v804, %v809
      %v814 = vmul.f32 %v746, %v783
      %v815 = vmul.f32 %v747, %v793
      %v816 = vmul.f32 %v748, %v803
      %v817 = vmul.f32 %v749, %v813
      %v818 = vld [vmem:[%s9] sm:$0x1]
      %v820 = vperm.slane %v818, 0
      %v822 = vmul.f32 %v814, %v820
      %v823 = vmul.f32 %v815, %v820
      %v824 = vmul.f32 %v816, %v820
      %v825 = vmul.f32 %v817, %v820
      %v826 = vld [vmem:[%s10] sm:$0x1]
      %v828 = vperm.slane %v826, 0
      %v830 = vadd.f32 %v822, %v828
      %v831 = vadd.f32 %v823, %v828
      %v832 = vadd.f32 %v824, %v828
      %v833 = vadd.f32 %v825, %v828
      %834 = vst.msk [vmem:[%s386] sm:$0xff] %vm394, %v830
      %835 = vst.msk [vmem:[%s386 + $0x8] sm:$0xff] %vm394, %v831
      %836 = vst.msk [vmem:[%s386 + $0x10] sm:$0xff] %vm394, %v832
      %837 = vst.msk [vmem:[%s386 + $0x18] sm:$0xff] %vm394, %v833
      %p838 = scmp.lt.s32.totalorder %s22, 1
      %s839 = scalar_select %p838, %s22, 1
      %s840 = smul.addr %s839, 4
      %s841 = smul.addr %s840, 8
      %s842 = scalar_lea.vmem %s11, %s841
      // Predicated region
      $region72: #{mccformers_s1_forward.6} parent=63 // pred_check
        %p843 = pneg %p276
      $region73: #{mccformers_s1_forward.6} parent=63 // pred_check_branch
        %845 = sbr.rel (%p843) target = $region75
      $region74: #{mccformers_s1_forward.6} parent=63 // pred_region
        _
      $region75: #{mccformers_s1_forward.6} parent=63 // pred_fallthru
        _
    $region64: #{mccformers_s1_forward.6} parent=5 // pred_fallthru
      _
    %p846 = scmp.le.s32.totalorder 2, %s17
    // Predicated region
    $region76: #{mccformers_s1_forward.6} parent=5 // pred_check
      %p847 = pneg %p846
    $region77: #{mccformers_s1_forward.6} parent=5 // pred_check_branch
      %849 = sbr.rel (%p847) target = $region79
    $region78: #{mccformers_s1_forward.6} parent=5 // pred_region
      %s850 = ssub.s32 %s17, 2
      // Predicated region
      $region80: #{mccformers_s1_forward.6} parent=78 // pred_check
        %p851 = pneg %p282
      $region81: #{mccformers_s1_forward.6} parent=78 // pred_check_branch
        %853 = sbr.rel (%p851) target = $region83
      $region82: #{mccformers_s1_forward.6} parent=78 // pred_region
        %p854 = scmp.lt.s32.totalorder %s23, 1
        %s855 = scalar_select %p854, %s23, 1
        %s856 = smul.addr %s855, 4
        %s857 = smul.addr %s856, 8
        %s858 = scalar_lea.vmem %s11, %s857
      $region83: #{mccformers_s1_forward.6} parent=78 // pred_fallthru
        _
    $region79: #{mccformers_s1_forward.6} parent=5 // pred_fallthru
      _
  $region6: #{mccformers_s1_forward.6} parent=0 // loop_footer
    %s21 = sadd.s32 1, %s17
  $region7: #{mccformers_s1_forward.6} parent=0 // loop_footer_branch
    %16 = sbr.rel target = $region3
  $region8: #{mccformers_s1_forward.6} parent=0 // loop_exit
    _

</llo_original>
